<compile_context>
chip_gen: v5e
topology: v5e:2x2
jax: 0.10.0
libtpu: 0.0.40
codegen_flags: <defaults>
</compile_context>

<pallas_src>
import math

import jax
import jax.numpy as jnp
from jax.experimental import pallas as pl
from jax.experimental.pallas import tpu as pltpu


def _round_up(x, m):
    return ((x + m - 1) // m) * m


def _fourier_posemb_kernel(coords_ref, bt2_ref, phase_ref, wt_ref, bias_ref,
                           out_ref):
    # coords_ref: (TN, 3)   bt2_ref: (3, 2F)   phase_ref: (1, 2F)
    # wt_ref: (2F, D) (= alpha * W.T)   bias_ref: (1, D)   out_ref: (TN, D)
    coords = coords_ref[...]                           # (TN, 3) f32
    bt2 = bt2_ref[...]                                 # (3, 2F) f32

    # K=3 projection on the VPU: 3 broadcast FMAs (exact f32, no MXU pass
    # wasted on K=3), plus the sin/cos phase offset -> lane-dense (TN, 2F).
    proj2 = (coords[:, 0:1] * bt2[0:1, :]
             + coords[:, 1:2] * bt2[1:2, :]
             + coords[:, 2:3] * bt2[2:3, :]
             + phase_ref[...])                         # (TN, 2F)

    # Single lane-dense transcendental pass: [sin(proj), cos(proj)].
    pe = jnp.sin(proj2)

    # Single K=2F matmul (alpha already folded into wt on the host).
    out = jnp.dot(pe.astype(wt_ref.dtype), wt_ref[...],
                  preferred_element_type=jnp.float32)

    out_ref[...] = (out + bias_ref[...]).astype(out_ref.dtype)


def scaled_fourier_pos_emb_3d(coords, B, alpha, W, bias, *, tile_n=2048,
                              out_dtype=None, use_bf16_matmul=False):
    """Forward pass of ScaledFourierPosEmb3D.

    coords: (..., 3) float; B: (F, 3); alpha: scalar; W: (D, 2F); bias: (D,).
    Returns (..., D); dtype = coords.dtype unless out_dtype is given.
    """
    assert coords.shape[-1] == 3
    lead_shape = coords.shape[:-1]
    n = 1
    for d in lead_shape:
        n *= d

    f = B.shape[0]
    d_model, two_f = W.shape
    assert two_f == 2 * f

    out_dtype = coords.dtype if out_dtype is None else out_dtype
    coords2d = coords.reshape(n, 3).astype(jnp.float32)

    # Tile selection: big tiles amortize per-grid-step overhead; cap so the
    # grid has >= 2 steps (v7x dual-TC sharding of the "parallel" axis).
    tile = max(8, min(_round_up(tile_n, 8), _round_up(pl.cdiv(n, 2), 8)))
    num_tiles = pl.cdiv(n, tile)

    # Host-side (one-time, tiny) weight prep for the phase trick.
    bt2 = jnp.concatenate([B.T, B.T], axis=1).astype(jnp.float32)     # (3, 2F)
    phase = jnp.concatenate(
        [jnp.zeros((1, f), jnp.float32),
         jnp.full((1, f), math.pi / 2, jnp.float32)], axis=1)         # (1, 2F)
    wt = jnp.asarray(alpha, jnp.float32) * W.T.astype(jnp.float32)    # (2F, D)
    if use_bf16_matmul:
        wt = wt.astype(jnp.bfloat16)
    bias2d = bias.reshape(1, d_model).astype(jnp.float32)

    # VMEM accounting (coords block lane-pads (tile, 3) -> (tile, 128)).
    f32 = 4
    out_bytes = jnp.dtype(out_dtype).itemsize
    coords_blk = tile * _round_up(3, 128) * f32
    out_blk = tile * _round_up(d_model, 128) * out_bytes
    interm = 2 * tile * _round_up(two_f, 128) * f32                   # proj2 + pe
    weights = (_round_up(3, 8) * _round_up(two_f, 128)
               + 8 * _round_up(two_f, 128)
               + _round_up(two_f, 8) * _round_up(d_model, 128)
               + 8 * _round_up(d_model, 128)) * f32
    vmem_bytes = 2 * (coords_blk + out_blk + weights) + interm        # 2x: dbl-buffer
    vmem_limit = int(min(32 * 1024 * 1024,
                         max(16 * 1024 * 1024, 2 * vmem_bytes)))

    out = pl.pallas_call(
        _fourier_posemb_kernel,
        out_shape=jax.ShapeDtypeStruct((n, d_model), out_dtype),
        grid=(num_tiles,),
        in_specs=[
            pl.BlockSpec((tile, 3), lambda i: (i, 0)),                # coords
            pl.BlockSpec((3, two_f), lambda i: (0, 0)),               # [B^T | B^T]
            pl.BlockSpec((1, two_f), lambda i: (0, 0)),               # phase
            pl.BlockSpec((two_f, d_model), lambda i: (0, 0)),         # alpha * W^T
            pl.BlockSpec((1, d_model), lambda i: (0, 0)),             # bias
        ],
        out_specs=pl.BlockSpec((tile, d_model), lambda i: (i, 0)),
        compiler_params=pltpu.CompilerParams(
            dimension_semantics=("parallel",),
            vmem_limit_bytes=vmem_limit,
        ),
    )(coords2d, bt2, phase, wt, bias2d)

    return out.reshape(*lead_shape, d_model)


if __name__ == "__main__":
    key = jax.random.PRNGKey(0)
    k_coords, k_B, k_W, k_b = jax.random.split(key, 4)

    # Small example consistent with the module: 3-D coords, F Fourier
    # features, lane-dense d_model, ragged point count (n=200 -> 2 tiles of
    # 104 with a masked partial last block; no pad / slice HBM passes).
    batch, seq = 2, 100
    num_features, d_model, init_scale = 64, 128, 5.0

    coords = jax.random.normal(k_coords, (batch, seq, 3), dtype=jnp.float32)
    # Parameter init mirroring the PyTorch module.
    B = jax.random.normal(k_B, (num_features, 3), dtype=jnp.float32) * init_scale
    alpha = jnp.float32(0.1)
    k = 1.0 / math.sqrt(2 * num_features)
    W = jax.random.uniform(k_W, (d_model, 2 * num_features), jnp.float32, -k, k)
    bias = jax.random.uniform(k_b, (d_model,), jnp.float32, -k, k)

    out = scaled_fourier_pos_emb_3d(coords, B, alpha, W, bias)
    out = jax.block_until_ready(out)

    # Pure-JAX reference (high precision).
    proj = jnp.einsum("bsk,fk->bsf", coords, B,
                      precision=jax.lax.Precision.HIGHEST)
    pe = alpha * jnp.concatenate([jnp.sin(proj), jnp.cos(proj)], axis=-1)
    ref = jnp.einsum("bsf,df->bsd", pe, W,
                     precision=jax.lax.Precision.HIGHEST) + bias

    assert out.shape == (batch, seq, d_model) and out.dtype == jnp.float32
    max_err = float(jnp.max(jnp.abs(out - ref)))
    assert jnp.allclose(out, ref, atol=5e-3, rtol=5e-3), max_err

    print("KERNEL_OK")
</pallas_src>

<mosaic_0001>
module attributes {stable_mosaic.version = 11 : i64} {
  func.func @_fourier_posemb_kernel(%arg0: i32, %arg1: memref<104x3xf32, #tpu.memory_space<vmem>>, %arg2: memref<3x128xf32, #tpu.memory_space<vmem>>, %arg3: memref<1x128xf32, #tpu.memory_space<vmem>>, %arg4: memref<128x128xf32, #tpu.memory_space<vmem>>, %arg5: memref<1x128xf32, #tpu.memory_space<vmem>>, %arg6: memref<104x128xf32, #tpu.memory_space<vmem>>) attributes {dimension_semantics = [#tpu.dimension_semantics<parallel>], iteration_bounds = array<i64: 2>, scalar_prefetch = 0 : i64, scratch_operands = 0 : i64, tpu.core_type = #tpu.core_type<tc>, window_params = [{transform_indices = @transform_0, window_bounds = array<i64: 104, 3>}, {pipeline_mode = #tpu.pipeline_mode<synchronous>, transform_indices = @transform_1, window_bounds = array<i64: 3, 128>}, {pipeline_mode = #tpu.pipeline_mode<synchronous>, transform_indices = @transform_2, window_bounds = array<i64: 1, 128>}, {pipeline_mode = #tpu.pipeline_mode<synchronous>, transform_indices = @transform_3, window_bounds = array<i64: 128, 128>}, {pipeline_mode = #tpu.pipeline_mode<synchronous>, transform_indices = @transform_4, window_bounds = array<i64: 1, 128>}, {transform_indices = @transform_5, window_bounds = array<i64: 104, 128>}]} {
    %c0 = arith.constant 0 : index
    %c0_0 = arith.constant 0 : index
    %0 = vector.load %arg1[%c0, %c0_0] : memref<104x3xf32, #tpu.memory_space<vmem>>, vector<104x3xf32>
    %c0_1 = arith.constant 0 : index
    %c0_2 = arith.constant 0 : index
    %1 = vector.load %arg2[%c0_1, %c0_2] : memref<3x128xf32, #tpu.memory_space<vmem>>, vector<3x128xf32>
    %2 = vector.extract_strided_slice %0 {offsets = [0, 0], sizes = [104, 1], strides = [1, 1]} : vector<104x3xf32> to vector<104x1xf32>
    %3 = vector.extract_strided_slice %1 {offsets = [0, 0], sizes = [1, 128], strides = [1, 1]} : vector<3x128xf32> to vector<1x128xf32>
    %4 = vector.broadcast %2 : vector<104x1xf32> to vector<104x128xf32>
    %5 = vector.broadcast %3 : vector<1x128xf32> to vector<104x128xf32>
    %6 = arith.mulf %4, %5 : vector<104x128xf32>
    %7 = vector.extract_strided_slice %0 {offsets = [0, 1], sizes = [104, 1], strides = [1, 1]} : vector<104x3xf32> to vector<104x1xf32>
    %8 = vector.extract_strided_slice %1 {offsets = [1, 0], sizes = [1, 128], strides = [1, 1]} : vector<3x128xf32> to vector<1x128xf32>
    %9 = vector.broadcast %7 : vector<104x1xf32> to vector<104x128xf32>
    %10 = vector.broadcast %8 : vector<1x128xf32> to vector<104x128xf32>
    %11 = arith.mulf %9, %10 : vector<104x128xf32>
    %12 = arith.addf %6, %11 : vector<104x128xf32>
    %13 = vector.extract_strided_slice %0 {offsets = [0, 2], sizes = [104, 1], strides = [1, 1]} : vector<104x3xf32> to vector<104x1xf32>
    %14 = vector.extract_strided_slice %1 {offsets = [2, 0], sizes = [1, 128], strides = [1, 1]} : vector<3x128xf32> to vector<1x128xf32>
    %15 = vector.broadcast %13 : vector<104x1xf32> to vector<104x128xf32>
    %16 = vector.broadcast %14 : vector<1x128xf32> to vector<104x128xf32>
    %17 = arith.mulf %15, %16 : vector<104x128xf32>
    %18 = arith.addf %12, %17 : vector<104x128xf32>
    %c0_3 = arith.constant 0 : index
    %c0_4 = arith.constant 0 : index
    %19 = vector.load %arg3[%c0_3, %c0_4] : memref<1x128xf32, #tpu.memory_space<vmem>>, vector<1x128xf32>
    %20 = vector.broadcast %19 : vector<1x128xf32> to vector<104x128xf32>
    %21 = arith.addf %18, %20 : vector<104x128xf32>
    %22 = math.sin %21 : vector<104x128xf32>
    %c0_5 = arith.constant 0 : index
    %c0_6 = arith.constant 0 : index
    %23 = vector.load %arg4[%c0_5, %c0_6] : memref<128x128xf32, #tpu.memory_space<vmem>>, vector<128x128xf32>
    %cst = arith.constant dense<0.000000e+00> : vector<104x128xf32>
    %24 = tpu.matmul %22, %23, %cst {dimension_numbers = #tpu.dot_dimension_numbers<[1], [0], [0], [1], [0, 0, 1, 1], [], []>} : vector<104x128xf32>, vector<128x128xf32>, vector<104x128xf32> -> vector<104x128xf32>
    %c0_7 = arith.constant 0 : index
    %c0_8 = arith.constant 0 : index
    %25 = vector.load %arg5[%c0_7, %c0_8] : memref<1x128xf32, #tpu.memory_space<vmem>>, vector<1x128xf32>
    %26 = vector.broadcast %25 : vector<1x128xf32> to vector<104x128xf32>
    %27 = arith.addf %24, %26 : vector<104x128xf32>
    %c0_9 = arith.constant 0 : index
    %c0_10 = arith.constant 0 : index
    %28 = vector.load %arg6[%c0_9, %c0_10] : memref<104x128xf32, #tpu.memory_space<vmem>>, vector<104x128xf32>
    tpu.vector_store %arg6[%c0_9, %c0_10], %27 {strides = array<i32>} : memref<104x128xf32, #tpu.memory_space<vmem>>, vector<104x128xf32>,
    return
  }
  func.func @transform_0(%arg0: i32) -> (i32, i32) {
    %c0_i32 = arith.constant 0 : i32
    %c0_i32_0 = arith.constant 0 : i32
    return %arg0, %c0_i32 : i32, i32
  }
  func.func @transform_1(%arg0: i32) -> (i32, i32) {
    %c0_i32 = arith.constant 0 : i32
    %c0_i32_0 = arith.constant 0 : i32
    %c0_i32_1 = arith.constant 0 : i32
    return %c0_i32, %c0_i32_0 : i32, i32
  }
  func.func @transform_2(%arg0: i32) -> (i32, i32) {
    %c0_i32 = arith.constant 0 : i32
    %c0_i32_0 = arith.constant 0 : i32
    %c0_i32_1 = arith.constant 0 : i32
    return %c0_i32, %c0_i32_0 : i32, i32
  }
  func.func @transform_3(%arg0: i32) -> (i32, i32) {
    %c0_i32 = arith.constant 0 : i32
    %c0_i32_0 = arith.constant 0 : i32
    %c0_i32_1 = arith.constant 0 : i32
    return %c0_i32, %c0_i32_0 : i32, i32
  }
  func.func @transform_4(%arg0: i32) -> (i32, i32) {
    %c0_i32 = arith.constant 0 : i32
    %c0_i32_0 = arith.constant 0 : i32
    %c0_i32_1 = arith.constant 0 : i32
    return %c0_i32, %c0_i32_0 : i32, i32
  }
  func.func @transform_5(%arg0: i32) -> (i32, i32) {
    %c0_i32 = arith.constant 0 : i32
    %c0_i32_0 = arith.constant 0 : i32
    return %arg0, %c0_i32 : i32, i32
  }
}

</mosaic_0001>

<llo_original>
// kernel: tpu_custom_call.1
$region0: #{tpu_custom_call.1}
  #allocation0 [shape = 'u32[]', space=smem, size = 0x4, offset = 0x4, fixed_abs, tag = 'smem constant byte address 0x4 - core index']
  #allocation1 [shape = 'u32[72,128]{1,0:T(1,128)}', space=vmem, size = 0x9000, scoped, tag = 'internal scratch']
  %s0 = inlined_call_operand.vmem [shape: f32[200,3], index: 0, kind: input, shape index: {}]
  %s1 = inlined_call_operand.vmem [shape: f32[3,128], index: 1, kind: input, shape index: {}]
  %s2 = inlined_call_operand.vmem [shape: f32[1,128], index: 2, kind: input, shape index: {}]
  %s3 = inlined_call_operand.vmem [shape: f32[128,128], index: 3, kind: input, shape index: {}]
  %s4 = inlined_call_operand.vmem [shape: f32[1,128], index: 4, kind: input, shape index: {}]
  %s5 = inlined_call_operand.hbm [shape: f32[200,128], index: 5, kind: output, shape index: {}]
  %s6 = sld [smem:[#allocation0]]
  $region53: #{tpu_custom_call.1} parent=0
    _
  %s8 = ssub.s32 1, %s6
  %s9 = scalar_select 0, %s8, %s6
  $region1: #{tpu_custom_call.1} parent=0
    #allocation2 [shape = 'u8[106496]{0}', space=vmem, size = 0x1a000, scoped, tag = 'output window, operand 0']
    #allocation3 [shape = 's32[2]{0}', space=sflag, size = 0x8, scoped, tag = 'scoped memory for tpu_custom_call.1']
    %10 = vsyncpa [#allocation3], 0
    %s11 = scalar_lea.sflag [#allocation3], 1
    %12 = vsyncpa %s11, 0
    loop: start=0, step=1, limit=4
    $region2: #{tpu_custom_call.1} parent=1 // loop_pre_header
      _
    $region3: #{tpu_custom_call.1} parent=1 // loop_header
      %s14 = sphi 0, %s18
      %p15 = scmp.ge.s32.totalorder %s14, 4
      %s24 = sphi 0, %s26
      %s27 = sphi 0, %s24
      %s28 = sphi 0, %s27
      %s44 = sphi 0, %s28
      %s48 = sphi 0, %s48
      %s50 = sphi 0, %s48
      %s51 = sphi 0, %s50
      %s65 = sphi 0, %s51
      %s69 = sphi 0, %s69
      %s71 = sphi 0, %s69
      %s72 = sphi 0, %s71
      %s86 = sphi 0, %s72
      %s90 = sphi 0, %s90
      %s92 = sphi 0, %s90
      %s93 = sphi 0, %s92
      %s107 = sphi 0, %s93
      %s111 = sphi 0, %s111
      %s113 = sphi 0, %s111
      %s114 = sphi 0, %s113
      %s128 = sphi 0, %s114
      %s134 = sphi 0, %s136
      %s137 = sphi 0, %s134
      %s138 = sphi 0, %s137
      %s154 = sphi 0, %s138
    $region4: #{tpu_custom_call.1} parent=1 // loop_header_branch
      %17 = sbr.rel (%p15) target = $region8
    $region5: #{tpu_custom_call.1} parent=1 // loop_body
      %s19 = ssub.s32 %s14, 1
      %s20 = ssub.s32 %s14, 2
      %s21 = sadd.s32 %s14, 1
      %s22 = ssub.s32 %s14, %s21
      %p23 = scmp.eq.s32.totalorder %s22, 0
      %s25 = sadd.s32 %s24, 1
      %s26 = scalar_select %p23, %s24, %s25
      %p29 = pneg %p23
      %p30 = scmp.eq.s32.totalorder %s14, 1
      %p31 = por %p29, %p30
      %p32 = scmp.ne.s32.totalorder %s24, %s27
      %p33 = scmp.eq.s32.totalorder %s14, 0
      %p34 = por %p32, %p33
      %p35 = scmp.ne.s32.totalorder %s24, %s27
      %p36 = scmp.eq.s32.totalorder %s19, 1
      %p37 = por %p35, %p36
      %p38 = scmp.ne.s32.totalorder %s27, %s28
      %p39 = scmp.eq.s32.totalorder %s19, 0
      %p40 = por %p38, %p39
      %p41 = scmp.ne.s32.totalorder %s27, %s28
      %p42 = scmp.eq.s32.totalorder %s20, 1
      %p43 = por %p41, %p42
      %p45 = scmp.ne.s32.totalorder %s28, %s44
      %p46 = scmp.eq.s32.totalorder %s20, 0
      %p47 = por %p45, %p46
      %s49 = sadd.s32 %s48, 1
      %p52 = scmp.eq.s32.totalorder %s14, 1
      %p53 = scmp.ne.s32.totalorder %s48, %s50
      %p54 = scmp.eq.s32.totalorder %s14, 0
      %p55 = por %p53, %p54
      %p56 = scmp.ne.s32.totalorder %s48, %s50
      %p57 = scmp.eq.s32.totalorder %s19, 1
      %p58 = por %p56, %p57
      %p59 = scmp.ne.s32.totalorder %s50, %s51
      %p60 = scmp.eq.s32.totalorder %s19, 0
      %p61 = por %p59, %p60
      %p62 = scmp.ne.s32.totalorder %s50, %s51
      %p63 = scmp.eq.s32.totalorder %s20, 1
      %p64 = por %p62, %p63
      %p66 = scmp.ne.s32.totalorder %s51, %s65
      %p67 = scmp.eq.s32.totalorder %s20, 0
      %p68 = por %p66, %p67
      %s70 = sadd.s32 %s69, 1
      %p73 = scmp.eq.s32.totalorder %s14, 1
      %p74 = scmp.ne.s32.totalorder %s69, %s71
      %p75 = scmp.eq.s32.totalorder %s14, 0
      %p76 = por %p74, %p75
      %p77 = scmp.ne.s32.totalorder %s69, %s71
      %p78 = scmp.eq.s32.totalorder %s19, 1
      %p79 = por %p77, %p78
      %p80 = scmp.ne.s32.totalorder %s71, %s72
      %p81 = scmp.eq.s32.totalorder %s19, 0
      %p82 = por %p80, %p81
      %p83 = scmp.ne.s32.totalorder %s71, %s72
      %p84 = scmp.eq.s32.totalorder %s20, 1
      %p85 = por %p83, %p84
      %p87 = scmp.ne.s32.totalorder %s72, %s86
      %p88 = scmp.eq.s32.totalorder %s20, 0
      %p89 = por %p87, %p88
      %s91 = sadd.s32 %s90, 1
      %p94 = scmp.eq.s32.totalorder %s14, 1
      %p95 = scmp.ne.s32.totalorder %s90, %s92
      %p96 = scmp.eq.s32.totalorder %s14, 0
      %p97 = por %p95, %p96
      %p98 = scmp.ne.s32.totalorder %s90, %s92
      %p99 = scmp.eq.s32.totalorder %s19, 1
      %p100 = por %p98, %p99
      %p101 = scmp.ne.s32.totalorder %s92, %s93
      %p102 = scmp.eq.s32.totalorder %s19, 0
      %p103 = por %p101, %p102
      %p104 = scmp.ne.s32.totalorder %s92, %s93
      %p105 = scmp.eq.s32.totalorder %s20, 1
      %p106 = por %p104, %p105
      %p108 = scmp.ne.s32.totalorder %s93, %s107
      %p109 = scmp.eq.s32.totalorder %s20, 0
      %p110 = por %p108, %p109
      %s112 = sadd.s32 %s111, 1
      %p115 = scmp.eq.s32.totalorder %s14, 1
      %p116 = scmp.ne.s32.totalorder %s111, %s113
      %p117 = scmp.eq.s32.totalorder %s14, 0
      %p118 = por %p116, %p117
      %p119 = scmp.ne.s32.totalorder %s111, %s113
      %p120 = scmp.eq.s32.totalorder %s19, 1
      %p121 = por %p119, %p120
      %p122 = scmp.ne.s32.totalorder %s113, %s114
      %p123 = scmp.eq.s32.totalorder %s19, 0
      %p124 = por %p122, %p123
      %p125 = scmp.ne.s32.totalorder %s113, %s114
      %p126 = scmp.eq.s32.totalorder %s20, 1
      %p127 = por %p125, %p126
      %p129 = scmp.ne.s32.totalorder %s114, %s128
      %p130 = scmp.eq.s32.totalorder %s20, 0
      %p131 = por %p129, %p130
      %s132 = ssub.s32 %s14, %s21
      %p133 = scmp.eq.s32.totalorder %s132, 0
      %s135 = sadd.s32 %s134, 1
      %s136 = scalar_select %p133, %s134, %s135
      %p139 = pneg %p133
      %p140 = scmp.eq.s32.totalorder %s14, 1
      %p141 = por %p139, %p140
      %p142 = scmp.ne.s32.totalorder %s134, %s137
      %p143 = scmp.eq.s32.totalorder %s14, 0
      %p144 = por %p142, %p143
      %p145 = scmp.ne.s32.totalorder %s134, %s137
      %p146 = scmp.eq.s32.totalorder %s19, 1
      %p147 = por %p145, %p146
      %p148 = scmp.ne.s32.totalorder %s137, %s138
      %p149 = scmp.eq.s32.totalorder %s19, 0
      %p150 = por %p148, %p149
      %p151 = scmp.ne.s32.totalorder %s137, %s138
      %p152 = scmp.eq.s32.totalorder %s20, 1
      %p153 = por %p151, %p152
      %p155 = scmp.ne.s32.totalorder %s138, %s154
      %p156 = scmp.eq.s32.totalorder %s20, 0
      %p157 = por %p155, %p156
      %p158 = scmp.le.s32.totalorder 1, %s14
      %p159 = scmp.lt.s32.totalorder %s14, 3
      %p160 = pnand %p158, %p159
      %p161 = pneg %p160
      // Predicated region
      $region9: #{tpu_custom_call.1} parent=5 // pred_check
        _
      $region10: #{tpu_custom_call.1} parent=5 // pred_check_branch
        %163 = sbr.rel (%p160) target = $region12
      $region11: #{tpu_custom_call.1} parent=5 // pred_region
        %s164 = ssub.s32 %s14, 1
        // Predicated region
        $region13: #{tpu_custom_call.1} parent=11 // pred_check
          %p165 = pneg %p61
        $region14: #{tpu_custom_call.1} parent=11 // pred_check_branch
          %167 = sbr.rel (%p165) target = $region16
        $region15: #{tpu_custom_call.1} parent=11 // pred_region
          _
        $region16: #{tpu_custom_call.1} parent=11 // pred_fallthru
          _
        // Predicated region
        $region17: #{tpu_custom_call.1} parent=11 // pred_check
          %p168 = pneg %p82
        $region18: #{tpu_custom_call.1} parent=11 // pred_check_branch
          %170 = sbr.rel (%p168) target = $region20
        $region19: #{tpu_custom_call.1} parent=11 // pred_region
          _
        $region20: #{tpu_custom_call.1} parent=11 // pred_fallthru
          _
        // Predicated region
        $region21: #{tpu_custom_call.1} parent=11 // pred_check
          %p171 = pneg %p103
        $region22: #{tpu_custom_call.1} parent=11 // pred_check_branch
          %173 = sbr.rel (%p171) target = $region24
        $region23: #{tpu_custom_call.1} parent=11 // pred_region
          _
        $region24: #{tpu_custom_call.1} parent=11 // pred_fallthru
          _
        // Predicated region
        $region25: #{tpu_custom_call.1} parent=11 // pred_check
          %p174 = pneg %p124
        $region26: #{tpu_custom_call.1} parent=11 // pred_check_branch
          %176 = sbr.rel (%p174) target = $region28
        $region27: #{tpu_custom_call.1} parent=11 // pred_region
          _
        $region28: #{tpu_custom_call.1} parent=11 // pred_fallthru
          _
      $region12: #{tpu_custom_call.1} parent=5 // pred_fallthru
        _
      %p177 = scmp.lt.s32.totalorder %s14, 2
      // Predicated region
      $region29: #{tpu_custom_call.1} parent=5 // pred_check
        %p178 = pneg %p177
      $region30: #{tpu_custom_call.1} parent=5 // pred_check_branch
        %180 = sbr.rel (%p178) target = $region32
      $region31: #{tpu_custom_call.1} parent=5 // pred_region
        // Predicated region
        $region33: #{tpu_custom_call.1} parent=31 // pred_check
          %p181 = pneg %p34
        $region34: #{tpu_custom_call.1} parent=31 // pred_check_branch
          %183 = sbr.rel (%p181) target = $region36
        $region35: #{tpu_custom_call.1} parent=31 // pred_region
          %s184 = smul.u32 13, %s14
          %s185 = ssub.s32 25, %s184
          %p186 = scmp.lt.s32.totalorder %s185, 13
          %s187 = scalar_select %p186, %s185, 13
          %s188 = smul.u32 8, %s187
          %p189 = scmp.lt.s32.totalorder %s184, 24
          %s190 = scalar_select %p189, %s184, 24
          %s191 = smul.addr %s190, 8
          %s192 = scalar_lea.vmem %s0, %s191
          %s193 = smul.u32 13, %s14
          %s194 = ssub.s32 25, %s193
          %p195 = scmp.lt.s32.totalorder %s194, 13
          %s196 = scalar_select %p195, %s194, 13
          %s197 = smul.u32 8, %s196
        $region36: #{tpu_custom_call.1} parent=31 // pred_fallthru
          _
      $region32: #{tpu_custom_call.1} parent=5 // pred_fallthru
        _
      %p198 = scmp.le.s32.totalorder 1, %s14
      %p199 = scmp.lt.s32.totalorder %s14, 3
      %p200 = pnand %p198, %p199
      %p201 = pneg %p200
      // Predicated region
      $region37: #{tpu_custom_call.1} parent=5 // pred_check
        _
      $region38: #{tpu_custom_call.1} parent=5 // pred_check_branch
        %203 = sbr.rel (%p200) target = $region40
      $region39: #{tpu_custom_call.1} parent=5 // pred_region
        %s204 = ssub.s32 %s14, 1
        %s205 = smul.u32 13, %s19
        %s206 = ssub.s32 25, %s205
        %p207 = scmp.lt.s32.totalorder %s206, 13
        %s208 = scalar_select %p207, %s206, 13
        %s209 = smul.u32 8, %s208
        %p210 = scmp.lt.s32.totalorder %s205, 24
        %s211 = scalar_select %p210, %s205, 24
        %s212 = smul.addr %s211, 8
        %s213 = scalar_lea.vmem %s0, %s212
        %p214 = pneg %p40
        %p215 = pneg %p37
        %p216 = pneg %p61
        %p217 = pneg %p58
        %p218 = pneg %p82
        %p219 = pneg %p79
        %p220 = pneg %p103
        %p221 = pneg %p100
        %p222 = pneg %p124
        %p223 = pneg %p121
        %p224 = pneg %p150
        %p225 = pneg %p147
        %s226 = sand.u32 %s137, 1
        %s227 = scalar_lea.sflag [#allocation3], %s226
        %s228 = sand.u32 %s137, 1
        %s229 = smul.addr %s228, 104
        %s230 = scalar_lea.vmem [#allocation2], %s229
        %s231 = smul.u32 13, %s19
        %s232 = ssub.s32 25, %s231
        %p233 = scmp.lt.s32.totalorder %s232, 13
        %s234 = scalar_select %p233, %s232, 13
        %s235 = smul.u32 8, %s234
        %p236 = scmp.lt.s32.totalorder %s231, 24
        %s237 = scalar_select %p236, %s231, 24
        %s238 = smul.addr %s237, 8
        %s239 = scalar_lea.vmem %s0, %s238
        %s240 = smul.u32 13, %s19
        %s241 = ssub.s32 25, %s240
        %p242 = scmp.lt.s32.totalorder %s241, 13
        %s243 = scalar_select %p242, %s241, 13
        %s244 = smul.u32 8, %s243
        %s245 = smul.u32 13, %s19
        %s246 = ssub.s32 25, %s245
        %p247 = scmp.lt.s32.totalorder %s246, 13
        %s248 = scalar_select %p247, %s246, 13
        %s249 = smul.u32 8, %s248
        %v250 = vld [vmem:[%s239] sm:$0xff]
        %v251 = vld [vmem:[%s239 + $0x8] sm:$0xff]
        %v252 = vld [vmem:[%s239 + $0x10] sm:$0xff]
        %v253 = vld [vmem:[%s239 + $0x18] sm:$0xff]
        %v254 = vld [vmem:[%s239 + $0x20] sm:$0xff]
        %v255 = vld [vmem:[%s239 + $0x28] sm:$0xff]
        %v256 = vld [vmem:[%s239 + $0x30] sm:$0xff]
        %v257 = vld [vmem:[%s239 + $0x38] sm:$0xff]
        %v258 = vld [vmem:[%s239 + $0x40] sm:$0xff]
        %v259 = vld [vmem:[%s239 + $0x48] sm:$0xff]
        %v260 = vld [vmem:[%s239 + $0x50] sm:$0xff]
        %v261 = vld [vmem:[%s239 + $0x58] sm:$0xff]
        %v262 = vld [vmem:[%s239 + $0x60] sm:$0xff]
        %v263 = vld [vmem:[%s1] sm:$0x7]
        %265 = vset.pattern.permute.xlu0 0
        %266 = vperm.xlu0 %265, %v250
        %v267 = vpop.permute.xlu0 %266
        %270 = vset.pattern.permute.xlu0 0
        %271 = vperm.xlu0 %270, %v251
        %v272 = vpop.permute.xlu0 %271
        %275 = vset.pattern.permute.xlu0 0
        %276 = vperm.xlu0 %275, %v252
        %v277 = vpop.permute.xlu0 %276
        %280 = vset.pattern.permute.xlu0 0
        %281 = vperm.xlu0 %280, %v253
        %v282 = vpop.permute.xlu0 %281
        %285 = vset.pattern.permute.xlu0 0
        %286 = vperm.xlu0 %285, %v254
        %v287 = vpop.permute.xlu0 %286
        %290 = vset.pattern.permute.xlu0 0
        %291 = vperm.xlu0 %290, %v255
        %v292 = vpop.permute.xlu0 %291
        %295 = vset.pattern.permute.xlu0 0
        %296 = vperm.xlu0 %295, %v256
        %v297 = vpop.permute.xlu0 %296
        %300 = vset.pattern.permute.xlu0 0
        %301 = vperm.xlu0 %300, %v257
        %v302 = vpop.permute.xlu0 %301
        %305 = vset.pattern.permute.xlu0 0
        %306 = vperm.xlu0 %305, %v258
        %v307 = vpop.permute.xlu0 %306
        %310 = vset.pattern.permute.xlu0 0
        %311 = vperm.xlu0 %310, %v259
        %v312 = vpop.permute.xlu0 %311
        %315 = vset.pattern.permute.xlu0 0
        %316 = vperm.xlu0 %315, %v260
        %v317 = vpop.permute.xlu0 %316
        %320 = vset.pattern.permute.xlu0 0
        %321 = vperm.xlu0 %320, %v261
        %v322 = vpop.permute.xlu0 %321
        %325 = vset.pattern.permute.xlu0 0
        %326 = vperm.xlu0 %325, %v262
        %v327 = vpop.permute.xlu0 %326
        %v329 = vperm.slane %v263, 0
        %v330 = vmul.f32 %v267, %v329
        %v331 = vmul.f32 %v272, %v329
        %v332 = vmul.f32 %v277, %v329
        %v333 = vmul.f32 %v282, %v329
        %v334 = vmul.f32 %v287, %v329
        %v335 = vmul.f32 %v292, %v329
        %v336 = vmul.f32 %v297, %v329
        %v337 = vmul.f32 %v302, %v329
        %v338 = vmul.f32 %v307, %v329
        %v339 = vmul.f32 %v312, %v329
        %v340 = vmul.f32 %v317, %v329
        %v341 = vmul.f32 %v322, %v329
        %v342 = vmul.f32 %v327, %v329
        %343 = vset.pattern.permute.xlu0 1
        %344 = vperm.xlu0 %343, %v250
        %v345 = vpop.permute.xlu0 %344
        %347 = vset.pattern.permute.xlu0 1
        %348 = vperm.xlu0 %347, %v251
        %v349 = vpop.permute.xlu0 %348
        %351 = vset.pattern.permute.xlu0 1
        %352 = vperm.xlu0 %351, %v252
        %v353 = vpop.permute.xlu0 %352
        %355 = vset.pattern.permute.xlu0 1
        %356 = vperm.xlu0 %355, %v253
        %v357 = vpop.permute.xlu0 %356
        %359 = vset.pattern.permute.xlu0 1
        %360 = vperm.xlu0 %359, %v254
        %v361 = vpop.permute.xlu0 %360
        %363 = vset.pattern.permute.xlu0 1
        %364 = vperm.xlu0 %363, %v255
        %v365 = vpop.permute.xlu0 %364
        %367 = vset.pattern.permute.xlu0 1
        %368 = vperm.xlu0 %367, %v256
        %v369 = vpop.permute.xlu0 %368
        %371 = vset.pattern.permute.xlu0 1
        %372 = vperm.xlu0 %371, %v257
        %v373 = vpop.permute.xlu0 %372
        %375 = vset.pattern.permute.xlu0 1
        %376 = vperm.xlu0 %375, %v258
        %v377 = vpop.permute.xlu0 %376
        %379 = vset.pattern.permute.xlu0 1
        %380 = vperm.xlu0 %379, %v259
        %v381 = vpop.permute.xlu0 %380
        %383 = vset.pattern.permute.xlu0 1
        %384 = vperm.xlu0 %383, %v260
        %v385 = vpop.permute.xlu0 %384
        %387 = vset.pattern.permute.xlu0 1
        %388 = vperm.xlu0 %387, %v261
        %v389 = vpop.permute.xlu0 %388
        %391 = vset.pattern.permute.xlu0 1
        %392 = vperm.xlu0 %391, %v262
        %v393 = vpop.permute.xlu0 %392
        %v395 = vperm.slane %v263, 1
        %v396 = vmul.f32 %v345, %v395
        %v397 = vmul.f32 %v349, %v395
        %v398 = vmul.f32 %v353, %v395
        %v399 = vmul.f32 %v357, %v395
        %v400 = vmul.f32 %v361, %v395
        %v401 = vmul.f32 %v365, %v395
        %v402 = vmul.f32 %v369, %v395
        %v403 = vmul.f32 %v373, %v395
        %v404 = vmul.f32 %v377, %v395
        %v405 = vmul.f32 %v381, %v395
        %v406 = vmul.f32 %v385, %v395
        %v407 = vmul.f32 %v389, %v395
        %v408 = vmul.f32 %v393, %v395
        %v409 = vadd.f32 %v330, %v396
        %v410 = vadd.f32 %v331, %v397
        %v411 = vadd.f32 %v332, %v398
        %v412 = vadd.f32 %v333, %v399
        %v413 = vadd.f32 %v334, %v400
        %v414 = vadd.f32 %v335, %v401
        %v415 = vadd.f32 %v336, %v402
        %v416 = vadd.f32 %v337, %v403
        %v417 = vadd.f32 %v338, %v404
        %v418 = vadd.f32 %v339, %v405
        %v419 = vadd.f32 %v340, %v406
        %v420 = vadd.f32 %v341, %v407
        %v421 = vadd.f32 %v342, %v408
        %422 = vset.pattern.permute.xlu0 2
        %423 = vperm.xlu0 %422, %v250
        %v424 = vpop.permute.xlu0 %423
        %426 = vset.pattern.permute.xlu0 2
        %427 = vperm.xlu0 %426, %v251
        %v428 = vpop.permute.xlu0 %427
        %430 = vset.pattern.permute.xlu0 2
        %431 = vperm.xlu0 %430, %v252
        %v432 = vpop.permute.xlu0 %431
        %434 = vset.pattern.permute.xlu0 2
        %435 = vperm.xlu0 %434, %v253
        %v436 = vpop.permute.xlu0 %435
        %438 = vset.pattern.permute.xlu0 2
        %439 = vperm.xlu0 %438, %v254
        %v440 = vpop.permute.xlu0 %439
        %442 = vset.pattern.permute.xlu0 2
        %443 = vperm.xlu0 %442, %v255
        %v444 = vpop.permute.xlu0 %443
        %446 = vset.pattern.permute.xlu0 2
        %447 = vperm.xlu0 %446, %v256
        %v448 = vpop.permute.xlu0 %447
        %450 = vset.pattern.permute.xlu0 2
        %451 = vperm.xlu0 %450, %v257
        %v452 = vpop.permute.xlu0 %451
        %454 = vset.pattern.permute.xlu0 2
        %455 = vperm.xlu0 %454, %v258
        %v456 = vpop.permute.xlu0 %455
        %458 = vset.pattern.permute.xlu0 2
        %459 = vperm.xlu0 %458, %v259
        %v460 = vpop.permute.xlu0 %459
        %462 = vset.pattern.permute.xlu0 2
        %463 = vperm.xlu0 %462, %v260
        %v464 = vpop.permute.xlu0 %463
        %466 = vset.pattern.permute.xlu0 2
        %467 = vperm.xlu0 %466, %v261
        %v468 = vpop.permute.xlu0 %467
        %470 = vset.pattern.permute.xlu0 2
        %471 = vperm.xlu0 %470, %v262
        %v472 = vpop.permute.xlu0 %471
        %v474 = vperm.slane %v263, 2
        %v475 = vmul.f32 %v424, %v474
        %v476 = vmul.f32 %v428, %v474
        %v477 = vmul.f32 %v432, %v474
        %v478 = vmul.f32 %v436, %v474
        %v479 = vmul.f32 %v440, %v474
        %v480 = vmul.f32 %v444, %v474
        %v481 = vmul.f32 %v448, %v474
        %v482 = vmul.f32 %v452, %v474
        %v483 = vmul.f32 %v456, %v474
        %v484 = vmul.f32 %v460, %v474
        %v485 = vmul.f32 %v464, %v474
        %v486 = vmul.f32 %v468, %v474
        %v487 = vmul.f32 %v472, %v474
        %v488 = vadd.f32 %v409, %v475
        %v489 = vadd.f32 %v410, %v476
        %v490 = vadd.f32 %v411, %v477
        %v491 = vadd.f32 %v412, %v478
        %v492 = vadd.f32 %v413, %v479
        %v493 = vadd.f32 %v414, %v480
        %v494 = vadd.f32 %v415, %v481
        %v495 = vadd.f32 %v416, %v482
        %v496 = vadd.f32 %v417, %v483
        %v497 = vadd.f32 %v418, %v484
        %v498 = vadd.f32 %v419, %v485
        %v499 = vadd.f32 %v420, %v486
        %v500 = vadd.f32 %v421, %v487
        %v501 = vld [vmem:[%s2] sm:$0x1]
        %v503 = vperm.slane %v501, 0
        %v505 = vadd.f32 %v488, %v503
        %v506 = vadd.f32 %v489, %v503
        %v507 = vadd.f32 %v490, %v503
        %v508 = vadd.f32 %v491, %v503
        %v509 = vadd.f32 %v492, %v503
        %v510 = vadd.f32 %v493, %v503
        %v511 = vadd.f32 %v494, %v503
        %v512 = vadd.f32 %v495, %v503
        %v513 = vadd.f32 %v496, %v503
        %v514 = vadd.f32 %v497, %v503
        %v515 = vadd.f32 %v498, %v503
        %v516 = vadd.f32 %v499, %v503
        %v517 = vadd.f32 %v500, %v503
        %v518 = vand.u32 2147483647, %v505
        %vm519 = vcmp.le.f32.partialorder %v518, 0.7853982
        %vm520 = vcmp.lt.s32.totalorder %v505, 0
        %v521 = vand.u32 %v505, 2139095040
        %v522 = vshrl.u32 %v521, 23
        %v523 = vsub.s32 %v522, 127
        %v524 = vand.u32 2147483647, %v505
        %v525 = vand.u32 %v524, 8388607
        %v526 = vor.u32 %v525, 8388608
        %v527 = vsub.s32 0, %v526
        %v528 = vadd.s32 %v523, 1
        %vm529 = vcmp.gt.s32.totalorder %v528, 0
        %v530 = vsel %vm529, %v528, 0
        %v531 = vshrl.u32 %v530, 5
        %v532 = vand.u32 %v530, 31
        %v533 = vsub.s32 32, %v532
        %v534 = vshrl.u32 683565275, %v533
        %v535 = vshll.u32 683565275, %v532
        %v536 = vshrl.u32 2475754826, %v533
        %v537 = vor.u32 %v535, %v536
        %v538 = vshll.u32 2475754826, %v532
        %v539 = vshrl.u32 2131351028, %v533
        %v540 = vor.u32 %v538, %v539
        %v541 = vshll.u32 2131351028, %v532
        %v542 = vshrl.u32 2102212464, %v533
        %v543 = vor.u32 %v541, %v542
        %v544 = vshll.u32 2102212464, %v532
        %v545 = vshrl.u32 920167782, %v533
        %v546 = vor.u32 %v544, %v545
        %v547 = vshll.u32 920167782, %v532
        %v548 = vshrl.u32 1326507024, %v533
        %v549 = vor.u32 %v547, %v548
        %vm550 = vcmp.lt.s32.totalorder %v531, 1
        %vm551 = vcmp.lt.s32.totalorder %v531, 2
        %vm552 = vcmp.lt.s32.totalorder %v531, 3
        %vm553 = vcmp.lt.s32.totalorder %v531, 4
        %v554 = vsel %vm550, %v534, %v537
        %v555 = vsel %vm553, %v543, 2102212464
        %v556 = vsel %vm552, %v540, %v555
        %v557 = vsel %vm551, %v554, %v556
        %v558 = vsel %vm550, %v537, %v540
        %v559 = vsel %vm553, %v546, 920167782
        %v560 = vsel %vm552, %v543, %v559
        %v561 = vsel %vm551, %v558, %v560
        %v562 = vsel %vm550, %v540, %v543
        %v563 = vsel %vm553, %v549, 1326507024
        %v564 = vsel %vm552, %v546, %v563
        %v565 = vsel %vm551, %v562, %v564
        %v566 = vshll.u32 %v526, 8
        %v567 = vand.u32 %v566, 65535
        %v568 = vshrl.u32 %v566, 16
        %v569 = vand.u32 %v565, 65535
        %v570 = vshrl.u32 %v565, 16
        %v571 = vmul.u32 %v567, %v569
        %v572 = vmul.u32 %v567, %v570
        %v573 = vmul.u32 %v568, %v569
        %v574 = vmul.u32 %v568, %v570
        %v575 = vshll.u32 %v572, 16
        %v576 = vshrl.u32 %v572, 16
        %v577 = vshll.u32 %v573, 16
        %v578 = vshrl.u32 %v573, 16
        %vm579 = vc.u32 %v571, %v575
        %v580 = vsel %vm579, 1, 0
        %v581 = vadd.s32 %v571, %v575
        %v582 = vadd.s32 %v574, %v580
        %vm583 = vc.u32 %v581, %v577
        %v584 = vsel %vm583, 1, 0
        %v585 = vadd.s32 %v581, %v577
        %v586 = vadd.s32 %v582, %v584
        %v587 = vadd.s32 %v586, %v576
        %v588 = vadd.s32 %v587, %v578
        %v589 = vand.u32 %v566, 65535
        %v590 = vshrl.u32 %v566, 16
        %v591 = vand.u32 %v561, 65535
        %v592 = vshrl.u32 %v561, 16
        %v593 = vmul.u32 %v589, %v591
        %v594 = vmul.u32 %v589, %v592
        %v595 = vmul.u32 %v590, %v591
        %v596 = vmul.u32 %v590, %v592
        %v597 = vshll.u32 %v594, 16
        %v598 = vshrl.u32 %v594, 16
        %v599 = vshll.u32 %v595, 16
        %v600 = vshrl.u32 %v595, 16
        %vm601 = vc.u32 %v593, %v597
        %v602 = vsel %vm601, 1, 0
        %v603 = vadd.s32 %v593, %v597
        %v604 = vadd.s32 %v596, %v602
        %vm605 = vc.u32 %v603, %v599
        %v606 = vsel %vm605, 1, 0
        %v607 = vadd.s32 %v603, %v599
        %v608 = vadd.s32 %v604, %v606
        %v609 = vadd.s32 %v608, %v598
        %v610 = vadd.s32 %v609, %v600
        %v611 = vmul.u32 %v566, %v557
        %v612 = vadd.s32 %v588, %v607
        %vm613 = vc.u32 %v588, %v607
        %v614 = vadd.s32 %v610, 1
        %v615 = vsel %vm613, %v614, %v610
        %v616 = vadd.s32 %v611, %v615
        %v617 = vadd.s32 %v616, 536870912
        %v618 = vshrl.u32 %v617, 30
        %v619 = vshll.u32 %v618, 30
        %v620 = vsub.s32 %v616, %v619
        %vm621 = vcmp.lt.s32.totalorder %v620, 0
        %v622 = vsub.s32 0, %v620
        %v623 = vsel %vm621, %v622, %v620
        %v624 = vclz %v623
        %v625 = vsub.s32 %v624, 2
        %vm626 = vcmp.gt.s32.totalorder 0, %v625
        %v627 = vsel %vm626, 0, %v625
        %v628 = vsub.s32 32, %v627
        %v629 = vshll.u32 %v620, %v627
        %v630 = vshrl.u32 %v612, %v628
        %v631 = vor.u32 %v629, %v630
        %v632 = vsub.s32 4294967266, %v627
        %v633 = vadd.s32 %v632, 127
        %v634 = vshll.u32 %v633, 23
        %v635 = vor.u32 4788187, %v634
        %v636 = vand.u32 2147483647, %v635
        %v638 = vcvt.s32.f32 %v631
        %v639 = vmul.f32 %v638, %v636
        %v640 = vxor.u32 %v639, 2147483648
        %v641 = vsel %vm520, %v640, %v639
        %v642 = vsub.s32 4, %v618
        %v643 = vsel %vm520, %v642, %v618
        %v644 = vsel %vm519, %v505, %v641
        %v645 = vsel %vm519, 0, %v643
        %v646 = vmul.f32 %v644, %v644
        %v647 = vmul.f32 %v646, -0.001358992
        %v648 = vadd.f32 %v647, 0.041655596
        %v649 = vmul.f32 %v646, %v648
        %v650 = vadd.f32 %v649, -0.4999988
        %v651 = vmul.f32 %v646, %v650
        %v652 = vadd.f32 1.0, %v651
        %v653 = vmul.f32 %v644, %v644
        %v654 = vmul.f32 %v653, -0.00019511016
        %v655 = vadd.f32 %v654, 0.008332121
        %v656 = vmul.f32 %v653, %v655
        %v657 = vadd.f32 %v656, -0.16666654
        %v658 = vmul.f32 %v653, %v657
        %v659 = vadd.f32 %v658, 1.0
        %v660 = vmul.f32 %v659, %v644
        %vm661 = vweird.f32 %v505
        %v662 = vadd.s32 %v645, 3
        %v663 = vand.u32 %v662, 3
        %vm664 = vcmp.lt.s32.totalorder %v663, 2
        %vm665 = vcmp.eq.s32.totalorder %v663, 0
        %v666 = vxor.u32 %v660, 2147483648
        %v667 = vsel %vm665, %v652, %v666
        %vm668 = vcmp.eq.s32.totalorder %v663, 2
        %v669 = vxor.u32 %v652, 2147483648
        %v670 = vsel %vm668, %v669, %v660
        %v671 = vsel %vm664, %v667, %v670
        %v672 = vsel %vm661, nan, %v671
        %v673 = vand.u32 2147483647, %v506
        %vm674 = vcmp.le.f32.partialorder %v673, 0.7853982
        %vm675 = vcmp.lt.s32.totalorder %v506, 0
        %v676 = vand.u32 %v506, 2139095040
        %v677 = vshrl.u32 %v676, 23
        %v678 = vsub.s32 %v677, 127
        %v679 = vand.u32 2147483647, %v506
        %v680 = vand.u32 %v679, 8388607
        %v681 = vor.u32 %v680, 8388608
        %v682 = vsub.s32 0, %v681
        %v683 = vadd.s32 %v678, 1
        %vm684 = vcmp.gt.s32.totalorder %v683, 0
        %v685 = vsel %vm684, %v683, 0
        %v686 = vshrl.u32 %v685, 5
        %v687 = vand.u32 %v685, 31
        %v688 = vsub.s32 32, %v687
        %v689 = vshrl.u32 683565275, %v688
        %v690 = vshll.u32 683565275, %v687
        %v691 = vshrl.u32 2475754826, %v688
        %v692 = vor.u32 %v690, %v691
        %v693 = vshll.u32 2475754826, %v687
        %v694 = vshrl.u32 2131351028, %v688
        %v695 = vor.u32 %v693, %v694
        %v696 = vshll.u32 2131351028, %v687
        %v697 = vshrl.u32 2102212464, %v688
        %v698 = vor.u32 %v696, %v697
        %v699 = vshll.u32 2102212464, %v687
        %v700 = vshrl.u32 920167782, %v688
        %v701 = vor.u32 %v699, %v700
        %v702 = vshll.u32 920167782, %v687
        %v703 = vshrl.u32 1326507024, %v688
        %v704 = vor.u32 %v702, %v703
        %vm705 = vcmp.lt.s32.totalorder %v686, 1
        %vm706 = vcmp.lt.s32.totalorder %v686, 2
        %vm707 = vcmp.lt.s32.totalorder %v686, 3
        %vm708 = vcmp.lt.s32.totalorder %v686, 4
        %v709 = vsel %vm705, %v689, %v692
        %v710 = vsel %vm708, %v698, 2102212464
        %v711 = vsel %vm707, %v695, %v710
        %v712 = vsel %vm706, %v709, %v711
        %v713 = vsel %vm705, %v692, %v695
        %v714 = vsel %vm708, %v701, 920167782
        %v715 = vsel %vm707, %v698, %v714
        %v716 = vsel %vm706, %v713, %v715
        %v717 = vsel %vm705, %v695, %v698
        %v718 = vsel %vm708, %v704, 1326507024
        %v719 = vsel %vm707, %v701, %v718
        %v720 = vsel %vm706, %v717, %v719
        %v721 = vshll.u32 %v681, 8
        %v722 = vand.u32 %v721, 65535
        %v723 = vshrl.u32 %v721, 16
        %v724 = vand.u32 %v720, 65535
        %v725 = vshrl.u32 %v720, 16
        %v726 = vmul.u32 %v722, %v724
        %v727 = vmul.u32 %v722, %v725
        %v728 = vmul.u32 %v723, %v724
        %v729 = vmul.u32 %v723, %v725
        %v730 = vshll.u32 %v727, 16
        %v731 = vshrl.u32 %v727, 16
        %v732 = vshll.u32 %v728, 16
        %v733 = vshrl.u32 %v728, 16
        %vm734 = vc.u32 %v726, %v730
        %v735 = vsel %vm734, 1, 0
        %v736 = vadd.s32 %v726, %v730
        %v737 = vadd.s32 %v729, %v735
        %vm738 = vc.u32 %v736, %v732
        %v739 = vsel %vm738, 1, 0
        %v740 = vadd.s32 %v736, %v732
        %v741 = vadd.s32 %v737, %v739
        %v742 = vadd.s32 %v741, %v731
        %v743 = vadd.s32 %v742, %v733
        %v744 = vand.u32 %v721, 65535
        %v745 = vshrl.u32 %v721, 16
        %v746 = vand.u32 %v716, 65535
        %v747 = vshrl.u32 %v716, 16
        %v748 = vmul.u32 %v744, %v746
        %v749 = vmul.u32 %v744, %v747
        %v750 = vmul.u32 %v745, %v746
        %v751 = vmul.u32 %v745, %v747
        %v752 = vshll.u32 %v749, 16
        %v753 = vshrl.u32 %v749, 16
        %v754 = vshll.u32 %v750, 16
        %v755 = vshrl.u32 %v750, 16
        %vm756 = vc.u32 %v748, %v752
        %v757 = vsel %vm756, 1, 0
        %v758 = vadd.s32 %v748, %v752
        %v759 = vadd.s32 %v751, %v757
        %vm760 = vc.u32 %v758, %v754
        %v761 = vsel %vm760, 1, 0
        %v762 = vadd.s32 %v758, %v754
        %v763 = vadd.s32 %v759, %v761
        %v764 = vadd.s32 %v763, %v753
        %v765 = vadd.s32 %v764, %v755
        %v766 = vmul.u32 %v721, %v712
        %v767 = vadd.s32 %v743, %v762
        %vm768 = vc.u32 %v743, %v762
        %v769 = vadd.s32 %v765, 1
        %v770 = vsel %vm768, %v769, %v765
        %v771 = vadd.s32 %v766, %v770
        %v772 = vadd.s32 %v771, 536870912
        %v773 = vshrl.u32 %v772, 30
        %v774 = vshll.u32 %v773, 30
        %v775 = vsub.s32 %v771, %v774
        %vm776 = vcmp.lt.s32.totalorder %v775, 0
        %v777 = vsub.s32 0, %v775
        %v778 = vsel %vm776, %v777, %v775
        %v779 = vclz %v778
        %v780 = vsub.s32 %v779, 2
        %vm781 = vcmp.gt.s32.totalorder 0, %v780
        %v782 = vsel %vm781, 0, %v780
        %v783 = vsub.s32 32, %v782
        %v784 = vshll.u32 %v775, %v782
        %v785 = vshrl.u32 %v767, %v783
        %v786 = vor.u32 %v784, %v785
        %v787 = vsub.s32 4294967266, %v782
        %v788 = vadd.s32 %v787, 127
        %v789 = vshll.u32 %v788, 23
        %v790 = vor.u32 4788187, %v789
        %v791 = vand.u32 2147483647, %v790
        %v793 = vcvt.s32.f32 %v786
        %v794 = vmul.f32 %v793, %v791
        %v795 = vxor.u32 %v794, 2147483648
        %v796 = vsel %vm675, %v795, %v794
        %v797 = vsub.s32 4, %v773
        %v798 = vsel %vm675, %v797, %v773
        %v799 = vsel %vm674, %v506, %v796
        %v800 = vsel %vm674, 0, %v798
        %v801 = vmul.f32 %v799, %v799
        %v802 = vmul.f32 %v801, -0.001358992
        %v803 = vadd.f32 %v802, 0.041655596
        %v804 = vmul.f32 %v801, %v803
        %v805 = vadd.f32 %v804, -0.4999988
        %v806 = vmul.f32 %v801, %v805
        %v807 = vadd.f32 1.0, %v806
        %v808 = vmul.f32 %v799, %v799
        %v809 = vmul.f32 %v808, -0.00019511016
        %v810 = vadd.f32 %v809, 0.008332121
        %v811 = vmul.f32 %v808, %v810
        %v812 = vadd.f32 %v811, -0.16666654
        %v813 = vmul.f32 %v808, %v812
        %v814 = vadd.f32 %v813, 1.0
        %v815 = vmul.f32 %v814, %v799
        %vm816 = vweird.f32 %v506
        %v817 = vadd.s32 %v800, 3
        %v818 = vand.u32 %v817, 3
        %vm819 = vcmp.lt.s32.totalorder %v818, 2
        %vm820 = vcmp.eq.s32.totalorder %v818, 0
        %v821 = vxor.u32 %v815, 2147483648
        %v822 = vsel %vm820, %v807, %v821
        %vm823 = vcmp.eq.s32.totalorder %v818, 2
        %v824 = vxor.u32 %v807, 2147483648
        %v825 = vsel %vm823, %v824, %v815
        %v826 = vsel %vm819, %v822, %v825
        %v827 = vsel %vm816, nan, %v826
        %v828 = vand.u32 2147483647, %v507
        %vm829 = vcmp.le.f32.partialorder %v828, 0.7853982
        %vm830 = vcmp.lt.s32.totalorder %v507, 0
        %v831 = vand.u32 %v507, 2139095040
        %v832 = vshrl.u32 %v831, 23
        %v833 = vsub.s32 %v832, 127
        %v834 = vand.u32 2147483647, %v507
        %v835 = vand.u32 %v834, 8388607
        %v836 = vor.u32 %v835, 8388608
        %v837 = vsub.s32 0, %v836
        %v838 = vadd.s32 %v833, 1
        %vm839 = vcmp.gt.s32.totalorder %v838, 0
        %v840 = vsel %vm839, %v838, 0
        %v841 = vshrl.u32 %v840, 5
        %v842 = vand.u32 %v840, 31
        %v843 = vsub.s32 32, %v842
        %v844 = vshrl.u32 683565275, %v843
        %v845 = vshll.u32 683565275, %v842
        %v846 = vshrl.u32 2475754826, %v843
        %v847 = vor.u32 %v845, %v846
        %v848 = vshll.u32 2475754826, %v842
        %v849 = vshrl.u32 2131351028, %v843
        %v850 = vor.u32 %v848, %v849
        %v851 = vshll.u32 2131351028, %v842
        %v852 = vshrl.u32 2102212464, %v843
        %v853 = vor.u32 %v851, %v852
        %v854 = vshll.u32 2102212464, %v842
        %v855 = vshrl.u32 920167782, %v843
        %v856 = vor.u32 %v854, %v855
        %v857 = vshll.u32 920167782, %v842
        %v858 = vshrl.u32 1326507024, %v843
        %v859 = vor.u32 %v857, %v858
        %vm860 = vcmp.lt.s32.totalorder %v841, 1
        %vm861 = vcmp.lt.s32.totalorder %v841, 2
        %vm862 = vcmp.lt.s32.totalorder %v841, 3
        %vm863 = vcmp.lt.s32.totalorder %v841, 4
        %v864 = vsel %vm860, %v844, %v847
        %v865 = vsel %vm863, %v853, 2102212464
        %v866 = vsel %vm862, %v850, %v865
        %v867 = vsel %vm861, %v864, %v866
        %v868 = vsel %vm860, %v847, %v850
        %v869 = vsel %vm863, %v856, 920167782
        %v870 = vsel %vm862, %v853, %v869
        %v871 = vsel %vm861, %v868, %v870
        %v872 = vsel %vm860, %v850, %v853
        %v873 = vsel %vm863, %v859, 1326507024
        %v874 = vsel %vm862, %v856, %v873
        %v875 = vsel %vm861, %v872, %v874
        %v876 = vshll.u32 %v836, 8
        %v877 = vand.u32 %v876, 65535
        %v878 = vshrl.u32 %v876, 16
        %v879 = vand.u32 %v875, 65535
        %v880 = vshrl.u32 %v875, 16
        %v881 = vmul.u32 %v877, %v879
        %v882 = vmul.u32 %v877, %v880
        %v883 = vmul.u32 %v878, %v879
        %v884 = vmul.u32 %v878, %v880
        %v885 = vshll.u32 %v882, 16
        %v886 = vshrl.u32 %v882, 16
        %v887 = vshll.u32 %v883, 16
        %v888 = vshrl.u32 %v883, 16
        %vm889 = vc.u32 %v881, %v885
        %v890 = vsel %vm889, 1, 0
        %v891 = vadd.s32 %v881, %v885
        %v892 = vadd.s32 %v884, %v890
        %vm893 = vc.u32 %v891, %v887
        %v894 = vsel %vm893, 1, 0
        %v895 = vadd.s32 %v891, %v887
        %v896 = vadd.s32 %v892, %v894
        %v897 = vadd.s32 %v896, %v886
        %v898 = vadd.s32 %v897, %v888
        %v899 = vand.u32 %v876, 65535
        %v900 = vshrl.u32 %v876, 16
        %v901 = vand.u32 %v871, 65535
        %v902 = vshrl.u32 %v871, 16
        %v903 = vmul.u32 %v899, %v901
        %v904 = vmul.u32 %v899, %v902
        %v905 = vmul.u32 %v900, %v901
        %v906 = vmul.u32 %v900, %v902
        %v907 = vshll.u32 %v904, 16
        %v908 = vshrl.u32 %v904, 16
        %v909 = vshll.u32 %v905, 16
        %v910 = vshrl.u32 %v905, 16
        %vm911 = vc.u32 %v903, %v907
        %v912 = vsel %vm911, 1, 0
        %v913 = vadd.s32 %v903, %v907
        %v914 = vadd.s32 %v906, %v912
        %vm915 = vc.u32 %v913, %v909
        %v916 = vsel %vm915, 1, 0
        %v917 = vadd.s32 %v913, %v909
        %v918 = vadd.s32 %v914, %v916
        %v919 = vadd.s32 %v918, %v908
        %v920 = vadd.s32 %v919, %v910
        %v921 = vmul.u32 %v876, %v867
        %v922 = vadd.s32 %v898, %v917
        %vm923 = vc.u32 %v898, %v917
        %v924 = vadd.s32 %v920, 1
        %v925 = vsel %vm923, %v924, %v920
        %v926 = vadd.s32 %v921, %v925
        %v927 = vadd.s32 %v926, 536870912
        %v928 = vshrl.u32 %v927, 30
        %v929 = vshll.u32 %v928, 30
        %v930 = vsub.s32 %v926, %v929
        %vm931 = vcmp.lt.s32.totalorder %v930, 0
        %v932 = vsub.s32 0, %v930
        %v933 = vsel %vm931, %v932, %v930
        %v934 = vclz %v933
        %v935 = vsub.s32 %v934, 2
        %vm936 = vcmp.gt.s32.totalorder 0, %v935
        %v937 = vsel %vm936, 0, %v935
        %v938 = vsub.s32 32, %v937
        %v939 = vshll.u32 %v930, %v937
        %v940 = vshrl.u32 %v922, %v938
        %v941 = vor.u32 %v939, %v940
        %v942 = vsub.s32 4294967266, %v937
        %v943 = vadd.s32 %v942, 127
        %v944 = vshll.u32 %v943, 23
        %v945 = vor.u32 4788187, %v944
        %v946 = vand.u32 2147483647, %v945
        %v948 = vcvt.s32.f32 %v941
        %v949 = vmul.f32 %v948, %v946
        %v950 = vxor.u32 %v949, 2147483648
        %v951 = vsel %vm830, %v950, %v949
        %v952 = vsub.s32 4, %v928
        %v953 = vsel %vm830, %v952, %v928
        %v954 = vsel %vm829, %v507, %v951
        %v955 = vsel %vm829, 0, %v953
        %v956 = vmul.f32 %v954, %v954
        %v957 = vmul.f32 %v956, -0.001358992
        %v958 = vadd.f32 %v957, 0.041655596
        %v959 = vmul.f32 %v956, %v958
        %v960 = vadd.f32 %v959, -0.4999988
        %v961 = vmul.f32 %v956, %v960
        %v962 = vadd.f32 1.0, %v961
        %v963 = vmul.f32 %v954, %v954
        %v964 = vmul.f32 %v963, -0.00019511016
        %v965 = vadd.f32 %v964, 0.008332121
        %v966 = vmul.f32 %v963, %v965
        %v967 = vadd.f32 %v966, -0.16666654
        %v968 = vmul.f32 %v963, %v967
        %v969 = vadd.f32 %v968, 1.0
        %v970 = vmul.f32 %v969, %v954
        %vm971 = vweird.f32 %v507
        %v972 = vadd.s32 %v955, 3
        %v973 = vand.u32 %v972, 3
        %vm974 = vcmp.lt.s32.totalorder %v973, 2
        %vm975 = vcmp.eq.s32.totalorder %v973, 0
        %v976 = vxor.u32 %v970, 2147483648
        %v977 = vsel %vm975, %v962, %v976
        %vm978 = vcmp.eq.s32.totalorder %v973, 2
        %v979 = vxor.u32 %v962, 2147483648
        %v980 = vsel %vm978, %v979, %v970
        %v981 = vsel %vm974, %v977, %v980
        %v982 = vsel %vm971, nan, %v981
        %v983 = vand.u32 2147483647, %v508
        %vm984 = vcmp.le.f32.partialorder %v983, 0.7853982
        %vm985 = vcmp.lt.s32.totalorder %v508, 0
        %v986 = vand.u32 %v508, 2139095040
        %v987 = vshrl.u32 %v986, 23
        %v988 = vsub.s32 %v987, 127
        %v989 = vand.u32 2147483647, %v508
        %v990 = vand.u32 %v989, 8388607
        %v991 = vor.u32 %v990, 8388608
        %v992 = vsub.s32 0, %v991
        %v993 = vadd.s32 %v988, 1
        %vm994 = vcmp.gt.s32.totalorder %v993, 0
        %v995 = vsel %vm994, %v993, 0
        %v996 = vshrl.u32 %v995, 5
        %v997 = vand.u32 %v995, 31
        %v998 = vsub.s32 32, %v997
        %v999 = vshrl.u32 683565275, %v998
        %v1000 = vshll.u32 683565275, %v997
        %v1001 = vshrl.u32 2475754826, %v998
        %v1002 = vor.u32 %v1000, %v1001
        %v1003 = vshll.u32 2475754826, %v997
        %v1004 = vshrl.u32 2131351028, %v998
        %v1005 = vor.u32 %v1003, %v1004
        %v1006 = vshll.u32 2131351028, %v997
        %v1007 = vshrl.u32 2102212464, %v998
        %v1008 = vor.u32 %v1006, %v1007
        %v1009 = vshll.u32 2102212464, %v997
        %v1010 = vshrl.u32 920167782, %v998
        %v1011 = vor.u32 %v1009, %v1010
        %v1012 = vshll.u32 920167782, %v997
        %v1013 = vshrl.u32 1326507024, %v998
        %v1014 = vor.u32 %v1012, %v1013
        %vm1015 = vcmp.lt.s32.totalorder %v996, 1
        %vm1016 = vcmp.lt.s32.totalorder %v996, 2
        %vm1017 = vcmp.lt.s32.totalorder %v996, 3
        %vm1018 = vcmp.lt.s32.totalorder %v996, 4
        %v1019 = vsel %vm1015, %v999, %v1002
        %v1020 = vsel %vm1018, %v1008, 2102212464
        %v1021 = vsel %vm1017, %v1005, %v1020
        %v1022 = vsel %vm1016, %v1019, %v1021
        %v1023 = vsel %vm1015, %v1002, %v1005
        %v1024 = vsel %vm1018, %v1011, 920167782
        %v1025 = vsel %vm1017, %v1008, %v1024
        %v1026 = vsel %vm1016, %v1023, %v1025
        %v1027 = vsel %vm1015, %v1005, %v1008
        %v1028 = vsel %vm1018, %v1014, 1326507024
        %v1029 = vsel %vm1017, %v1011, %v1028
        %v1030 = vsel %vm1016, %v1027, %v1029
        %v1031 = vshll.u32 %v991, 8
        %v1032 = vand.u32 %v1031, 65535
        %v1033 = vshrl.u32 %v1031, 16
        %v1034 = vand.u32 %v1030, 65535
        %v1035 = vshrl.u32 %v1030, 16
        %v1036 = vmul.u32 %v1032, %v1034
        %v1037 = vmul.u32 %v1032, %v1035
        %v1038 = vmul.u32 %v1033, %v1034
        %v1039 = vmul.u32 %v1033, %v1035
        %v1040 = vshll.u32 %v1037, 16
        %v1041 = vshrl.u32 %v1037, 16
        %v1042 = vshll.u32 %v1038, 16
        %v1043 = vshrl.u32 %v1038, 16
        %vm1044 = vc.u32 %v1036, %v1040
        %v1045 = vsel %vm1044, 1, 0
        %v1046 = vadd.s32 %v1036, %v1040
        %v1047 = vadd.s32 %v1039, %v1045
        %vm1048 = vc.u32 %v1046, %v1042
        %v1049 = vsel %vm1048, 1, 0
        %v1050 = vadd.s32 %v1046, %v1042
        %v1051 = vadd.s32 %v1047, %v1049
        %v1052 = vadd.s32 %v1051, %v1041
        %v1053 = vadd.s32 %v1052, %v1043
        %v1054 = vand.u32 %v1031, 65535
        %v1055 = vshrl.u32 %v1031, 16
        %v1056 = vand.u32 %v1026, 65535
        %v1057 = vshrl.u32 %v1026, 16
        %v1058 = vmul.u32 %v1054, %v1056
        %v1059 = vmul.u32 %v1054, %v1057
        %v1060 = vmul.u32 %v1055, %v1056
        %v1061 = vmul.u32 %v1055, %v1057
        %v1062 = vshll.u32 %v1059, 16
        %v1063 = vshrl.u32 %v1059, 16
        %v1064 = vshll.u32 %v1060, 16
        %v1065 = vshrl.u32 %v1060, 16
        %vm1066 = vc.u32 %v1058, %v1062
        %v1067 = vsel %vm1066, 1, 0
        %v1068 = vadd.s32 %v1058, %v1062
        %v1069 = vadd.s32 %v1061, %v1067
        %vm1070 = vc.u32 %v1068, %v1064
        %v1071 = vsel %vm1070, 1, 0
        %v1072 = vadd.s32 %v1068, %v1064
        %v1073 = vadd.s32 %v1069, %v1071
        %v1074 = vadd.s32 %v1073, %v1063
        %v1075 = vadd.s32 %v1074, %v1065
        %v1076 = vmul.u32 %v1031, %v1022
        %v1077 = vadd.s32 %v1053, %v1072
        %vm1078 = vc.u32 %v1053, %v1072
        %v1079 = vadd.s32 %v1075, 1
        %v1080 = vsel %vm1078, %v1079, %v1075
        %v1081 = vadd.s32 %v1076, %v1080
        %v1082 = vadd.s32 %v1081, 536870912
        %v1083 = vshrl.u32 %v1082, 30
        %v1084 = vshll.u32 %v1083, 30
        %v1085 = vsub.s32 %v1081, %v1084
        %vm1086 = vcmp.lt.s32.totalorder %v1085, 0
        %v1087 = vsub.s32 0, %v1085
        %v1088 = vsel %vm1086, %v1087, %v1085
        %v1089 = vclz %v1088
        %v1090 = vsub.s32 %v1089, 2
        %vm1091 = vcmp.gt.s32.totalorder 0, %v1090
        %v1092 = vsel %vm1091, 0, %v1090
        %v1093 = vsub.s32 32, %v1092
        %v1094 = vshll.u32 %v1085, %v1092
        %v1095 = vshrl.u32 %v1077, %v1093
        %v1096 = vor.u32 %v1094, %v1095
        %v1097 = vsub.s32 4294967266, %v1092
        %v1098 = vadd.s32 %v1097, 127
        %v1099 = vshll.u32 %v1098, 23
        %v1100 = vor.u32 4788187, %v1099
        %v1101 = vand.u32 2147483647, %v1100
        %v1103 = vcvt.s32.f32 %v1096
        %v1104 = vmul.f32 %v1103, %v1101
        %v1105 = vxor.u32 %v1104, 2147483648
        %v1106 = vsel %vm985, %v1105, %v1104
        %v1107 = vsub.s32 4, %v1083
        %v1108 = vsel %vm985, %v1107, %v1083
        %v1109 = vsel %vm984, %v508, %v1106
        %v1110 = vsel %vm984, 0, %v1108
        %v1111 = vmul.f32 %v1109, %v1109
        %v1112 = vmul.f32 %v1111, -0.001358992
        %v1113 = vadd.f32 %v1112, 0.041655596
        %v1114 = vmul.f32 %v1111, %v1113
        %v1115 = vadd.f32 %v1114, -0.4999988
        %v1116 = vmul.f32 %v1111, %v1115
        %v1117 = vadd.f32 1.0, %v1116
        %v1118 = vmul.f32 %v1109, %v1109
        %v1119 = vmul.f32 %v1118, -0.00019511016
        %v1120 = vadd.f32 %v1119, 0.008332121
        %v1121 = vmul.f32 %v1118, %v1120
        %v1122 = vadd.f32 %v1121, -0.16666654
        %v1123 = vmul.f32 %v1118, %v1122
        %v1124 = vadd.f32 %v1123, 1.0
        %v1125 = vmul.f32 %v1124, %v1109
        %vm1126 = vweird.f32 %v508
        %v1127 = vadd.s32 %v1110, 3
        %v1128 = vand.u32 %v1127, 3
        %vm1129 = vcmp.lt.s32.totalorder %v1128, 2
        %vm1130 = vcmp.eq.s32.totalorder %v1128, 0
        %v1131 = vxor.u32 %v1125, 2147483648
        %v1132 = vsel %vm1130, %v1117, %v1131
        %vm1133 = vcmp.eq.s32.totalorder %v1128, 2
        %v1134 = vxor.u32 %v1117, 2147483648
        %v1135 = vsel %vm1133, %v1134, %v1125
        %v1136 = vsel %vm1129, %v1132, %v1135
        %v1137 = vsel %vm1126, nan, %v1136
        %v1138 = vand.u32 2147483647, %v509
        %vm1139 = vcmp.le.f32.partialorder %v1138, 0.7853982
        %vm1140 = vcmp.lt.s32.totalorder %v509, 0
        %v1141 = vand.u32 %v509, 2139095040
        %v1142 = vshrl.u32 %v1141, 23
        %v1143 = vsub.s32 %v1142, 127
        %v1144 = vand.u32 2147483647, %v509
        %v1145 = vand.u32 %v1144, 8388607
        %v1146 = vor.u32 %v1145, 8388608
        %v1147 = vsub.s32 0, %v1146
        %v1148 = vadd.s32 %v1143, 1
        %vm1149 = vcmp.gt.s32.totalorder %v1148, 0
        %v1150 = vsel %vm1149, %v1148, 0
        %v1151 = vshrl.u32 %v1150, 5
        %v1152 = vand.u32 %v1150, 31
        %v1153 = vsub.s32 32, %v1152
        %v1154 = vshrl.u32 683565275, %v1153
        %v1155 = vshll.u32 683565275, %v1152
        %v1156 = vshrl.u32 2475754826, %v1153
        %v1157 = vor.u32 %v1155, %v1156
        %v1158 = vshll.u32 2475754826, %v1152
        %v1159 = vshrl.u32 2131351028, %v1153
        %v1160 = vor.u32 %v1158, %v1159
        %v1161 = vshll.u32 2131351028, %v1152
        %v1162 = vshrl.u32 2102212464, %v1153
        %v1163 = vor.u32 %v1161, %v1162
        %v1164 = vshll.u32 2102212464, %v1152
        %v1165 = vshrl.u32 920167782, %v1153
        %v1166 = vor.u32 %v1164, %v1165
        %v1167 = vshll.u32 920167782, %v1152
        %v1168 = vshrl.u32 1326507024, %v1153
        %v1169 = vor.u32 %v1167, %v1168
        %vm1170 = vcmp.lt.s32.totalorder %v1151, 1
        %vm1171 = vcmp.lt.s32.totalorder %v1151, 2
        %vm1172 = vcmp.lt.s32.totalorder %v1151, 3
        %vm1173 = vcmp.lt.s32.totalorder %v1151, 4
        %v1174 = vsel %vm1170, %v1154, %v1157
        %v1175 = vsel %vm1173, %v1163, 2102212464
        %v1176 = vsel %vm1172, %v1160, %v1175
        %v1177 = vsel %vm1171, %v1174, %v1176
        %v1178 = vsel %vm1170, %v1157, %v1160
        %v1179 = vsel %vm1173, %v1166, 920167782
        %v1180 = vsel %vm1172, %v1163, %v1179
        %v1181 = vsel %vm1171, %v1178, %v1180
        %v1182 = vsel %vm1170, %v1160, %v1163
        %v1183 = vsel %vm1173, %v1169, 1326507024
        %v1184 = vsel %vm1172, %v1166, %v1183
        %v1185 = vsel %vm1171, %v1182, %v1184
        %v1186 = vshll.u32 %v1146, 8
        %v1187 = vand.u32 %v1186, 65535
        %v1188 = vshrl.u32 %v1186, 16
        %v1189 = vand.u32 %v1185, 65535
        %v1190 = vshrl.u32 %v1185, 16
        %v1191 = vmul.u32 %v1187, %v1189
        %v1192 = vmul.u32 %v1187, %v1190
        %v1193 = vmul.u32 %v1188, %v1189
        %v1194 = vmul.u32 %v1188, %v1190
        %v1195 = vshll.u32 %v1192, 16
        %v1196 = vshrl.u32 %v1192, 16
        %v1197 = vshll.u32 %v1193, 16
        %v1198 = vshrl.u32 %v1193, 16
        %vm1199 = vc.u32 %v1191, %v1195
        %v1200 = vsel %vm1199, 1, 0
        %v1201 = vadd.s32 %v1191, %v1195
        %v1202 = vadd.s32 %v1194, %v1200
        %vm1203 = vc.u32 %v1201, %v1197
        %v1204 = vsel %vm1203, 1, 0
        %v1205 = vadd.s32 %v1201, %v1197
        %v1206 = vadd.s32 %v1202, %v1204
        %v1207 = vadd.s32 %v1206, %v1196
        %v1208 = vadd.s32 %v1207, %v1198
        %v1209 = vand.u32 %v1186, 65535
        %v1210 = vshrl.u32 %v1186, 16
        %v1211 = vand.u32 %v1181, 65535
        %v1212 = vshrl.u32 %v1181, 16
        %v1213 = vmul.u32 %v1209, %v1211
        %v1214 = vmul.u32 %v1209, %v1212
        %v1215 = vmul.u32 %v1210, %v1211
        %v1216 = vmul.u32 %v1210, %v1212
        %v1217 = vshll.u32 %v1214, 16
        %v1218 = vshrl.u32 %v1214, 16
        %v1219 = vshll.u32 %v1215, 16
        %v1220 = vshrl.u32 %v1215, 16
        %vm1221 = vc.u32 %v1213, %v1217
        %v1222 = vsel %vm1221, 1, 0
        %v1223 = vadd.s32 %v1213, %v1217
        %v1224 = vadd.s32 %v1216, %v1222
        %vm1225 = vc.u32 %v1223, %v1219
        %v1226 = vsel %vm1225, 1, 0
        %v1227 = vadd.s32 %v1223, %v1219
        %v1228 = vadd.s32 %v1224, %v1226
        %v1229 = vadd.s32 %v1228, %v1218
        %v1230 = vadd.s32 %v1229, %v1220
        %v1231 = vmul.u32 %v1186, %v1177
        %v1232 = vadd.s32 %v1208, %v1227
        %vm1233 = vc.u32 %v1208, %v1227
        %v1234 = vadd.s32 %v1230, 1
        %v1235 = vsel %vm1233, %v1234, %v1230
        %v1236 = vadd.s32 %v1231, %v1235
        %v1237 = vadd.s32 %v1236, 536870912
        %v1238 = vshrl.u32 %v1237, 30
        %v1239 = vshll.u32 %v1238, 30
        %v1240 = vsub.s32 %v1236, %v1239
        %vm1241 = vcmp.lt.s32.totalorder %v1240, 0
        %v1242 = vsub.s32 0, %v1240
        %v1243 = vsel %vm1241, %v1242, %v1240
        %v1244 = vclz %v1243
        %v1245 = vsub.s32 %v1244, 2
        %vm1246 = vcmp.gt.s32.totalorder 0, %v1245
        %v1247 = vsel %vm1246, 0, %v1245
        %v1248 = vsub.s32 32, %v1247
        %v1249 = vshll.u32 %v1240, %v1247
        %v1250 = vshrl.u32 %v1232, %v1248
        %v1251 = vor.u32 %v1249, %v1250
        %v1252 = vsub.s32 4294967266, %v1247
        %v1253 = vadd.s32 %v1252, 127
        %v1254 = vshll.u32 %v1253, 23
        %v1255 = vor.u32 4788187, %v1254
        %v1256 = vand.u32 2147483647, %v1255
        %v1258 = vcvt.s32.f32 %v1251
        %v1259 = vmul.f32 %v1258, %v1256
        %v1260 = vxor.u32 %v1259, 2147483648
        %v1261 = vsel %vm1140, %v1260, %v1259
        %v1262 = vsub.s32 4, %v1238
        %v1263 = vsel %vm1140, %v1262, %v1238
        %v1264 = vsel %vm1139, %v509, %v1261
        %v1265 = vsel %vm1139, 0, %v1263
        %v1266 = vmul.f32 %v1264, %v1264
        %v1267 = vmul.f32 %v1266, -0.001358992
        %v1268 = vadd.f32 %v1267, 0.041655596
        %v1269 = vmul.f32 %v1266, %v1268
        %v1270 = vadd.f32 %v1269, -0.4999988
        %v1271 = vmul.f32 %v1266, %v1270
        %v1272 = vadd.f32 1.0, %v1271
        %v1273 = vmul.f32 %v1264, %v1264
        %v1274 = vmul.f32 %v1273, -0.00019511016
        %v1275 = vadd.f32 %v1274, 0.008332121
        %v1276 = vmul.f32 %v1273, %v1275
        %v1277 = vadd.f32 %v1276, -0.16666654
        %v1278 = vmul.f32 %v1273, %v1277
        %v1279 = vadd.f32 %v1278, 1.0
        %v1280 = vmul.f32 %v1279, %v1264
        %vm1281 = vweird.f32 %v509
        %v1282 = vadd.s32 %v1265, 3
        %v1283 = vand.u32 %v1282, 3
        %vm1284 = vcmp.lt.s32.totalorder %v1283, 2
        %vm1285 = vcmp.eq.s32.totalorder %v1283, 0
        %v1286 = vxor.u32 %v1280, 2147483648
        %v1287 = vsel %vm1285, %v1272, %v1286
        %vm1288 = vcmp.eq.s32.totalorder %v1283, 2
        %v1289 = vxor.u32 %v1272, 2147483648
        %v1290 = vsel %vm1288, %v1289, %v1280
        %v1291 = vsel %vm1284, %v1287, %v1290
        %v1292 = vsel %vm1281, nan, %v1291
        %v1293 = vand.u32 2147483647, %v510
        %vm1294 = vcmp.le.f32.partialorder %v1293, 0.7853982
        %vm1295 = vcmp.lt.s32.totalorder %v510, 0
        %v1296 = vand.u32 %v510, 2139095040
        %v1297 = vshrl.u32 %v1296, 23
        %v1298 = vsub.s32 %v1297, 127
        %v1299 = vand.u32 2147483647, %v510
        %v1300 = vand.u32 %v1299, 8388607
        %v1301 = vor.u32 %v1300, 8388608
        %v1302 = vsub.s32 0, %v1301
        %v1303 = vadd.s32 %v1298, 1
        %vm1304 = vcmp.gt.s32.totalorder %v1303, 0
        %v1305 = vsel %vm1304, %v1303, 0
        %v1306 = vshrl.u32 %v1305, 5
        %v1307 = vand.u32 %v1305, 31
        %v1308 = vsub.s32 32, %v1307
        %v1309 = vshrl.u32 683565275, %v1308
        %v1310 = vshll.u32 683565275, %v1307
        %v1311 = vshrl.u32 2475754826, %v1308
        %v1312 = vor.u32 %v1310, %v1311
        %v1313 = vshll.u32 2475754826, %v1307
        %v1314 = vshrl.u32 2131351028, %v1308
        %v1315 = vor.u32 %v1313, %v1314
        %v1316 = vshll.u32 2131351028, %v1307
        %v1317 = vshrl.u32 2102212464, %v1308
        %v1318 = vor.u32 %v1316, %v1317
        %v1319 = vshll.u32 2102212464, %v1307
        %v1320 = vshrl.u32 920167782, %v1308
        %v1321 = vor.u32 %v1319, %v1320
        %v1322 = vshll.u32 920167782, %v1307
        %v1323 = vshrl.u32 1326507024, %v1308
        %v1324 = vor.u32 %v1322, %v1323
        %vm1325 = vcmp.lt.s32.totalorder %v1306, 1
        %vm1326 = vcmp.lt.s32.totalorder %v1306, 2
        %vm1327 = vcmp.lt.s32.totalorder %v1306, 3
        %vm1328 = vcmp.lt.s32.totalorder %v1306, 4
        %v1329 = vsel %vm1325, %v1309, %v1312
        %v1330 = vsel %vm1328, %v1318, 2102212464
        %v1331 = vsel %vm1327, %v1315, %v1330
        %v1332 = vsel %vm1326, %v1329, %v1331
        %v1333 = vsel %vm1325, %v1312, %v1315
        %v1334 = vsel %vm1328, %v1321, 920167782
        %v1335 = vsel %vm1327, %v1318, %v1334
        %v1336 = vsel %vm1326, %v1333, %v1335
        %v1337 = vsel %vm1325, %v1315, %v1318
        %v1338 = vsel %vm1328, %v1324, 1326507024
        %v1339 = vsel %vm1327, %v1321, %v1338
        %v1340 = vsel %vm1326, %v1337, %v1339
        %v1341 = vshll.u32 %v1301, 8
        %v1342 = vand.u32 %v1341, 65535
        %v1343 = vshrl.u32 %v1341, 16
        %v1344 = vand.u32 %v1340, 65535
        %v1345 = vshrl.u32 %v1340, 16
        %v1346 = vmul.u32 %v1342, %v1344
        %v1347 = vmul.u32 %v1342, %v1345
        %v1348 = vmul.u32 %v1343, %v1344
        %v1349 = vmul.u32 %v1343, %v1345
        %v1350 = vshll.u32 %v1347, 16
        %v1351 = vshrl.u32 %v1347, 16
        %v1352 = vshll.u32 %v1348, 16
        %v1353 = vshrl.u32 %v1348, 16
        %vm1354 = vc.u32 %v1346, %v1350
        %v1355 = vsel %vm1354, 1, 0
        %v1356 = vadd.s32 %v1346, %v1350
        %v1357 = vadd.s32 %v1349, %v1355
        %vm1358 = vc.u32 %v1356, %v1352
        %v1359 = vsel %vm1358, 1, 0
        %v1360 = vadd.s32 %v1356, %v1352
        %v1361 = vadd.s32 %v1357, %v1359
        %v1362 = vadd.s32 %v1361, %v1351
        %v1363 = vadd.s32 %v1362, %v1353
        %v1364 = vand.u32 %v1341, 65535
        %v1365 = vshrl.u32 %v1341, 16
        %v1366 = vand.u32 %v1336, 65535
        %v1367 = vshrl.u32 %v1336, 16
        %v1368 = vmul.u32 %v1364, %v1366
        %v1369 = vmul.u32 %v1364, %v1367
        %v1370 = vmul.u32 %v1365, %v1366
        %v1371 = vmul.u32 %v1365, %v1367
        %v1372 = vshll.u32 %v1369, 16
        %v1373 = vshrl.u32 %v1369, 16
        %v1374 = vshll.u32 %v1370, 16
        %v1375 = vshrl.u32 %v1370, 16
        %vm1376 = vc.u32 %v1368, %v1372
        %v1377 = vsel %vm1376, 1, 0
        %v1378 = vadd.s32 %v1368, %v1372
        %v1379 = vadd.s32 %v1371, %v1377
        %vm1380 = vc.u32 %v1378, %v1374
        %v1381 = vsel %vm1380, 1, 0
        %v1382 = vadd.s32 %v1378, %v1374
        %v1383 = vadd.s32 %v1379, %v1381
        %v1384 = vadd.s32 %v1383, %v1373
        %v1385 = vadd.s32 %v1384, %v1375
        %v1386 = vmul.u32 %v1341, %v1332
        %v1387 = vadd.s32 %v1363, %v1382
        %vm1388 = vc.u32 %v1363, %v1382
        %v1389 = vadd.s32 %v1385, 1
        %v1390 = vsel %vm1388, %v1389, %v1385
        %v1391 = vadd.s32 %v1386, %v1390
        %v1392 = vadd.s32 %v1391, 536870912
        %v1393 = vshrl.u32 %v1392, 30
        %v1394 = vshll.u32 %v1393, 30
        %v1395 = vsub.s32 %v1391, %v1394
        %vm1396 = vcmp.lt.s32.totalorder %v1395, 0
        %v1397 = vsub.s32 0, %v1395
        %v1398 = vsel %vm1396, %v1397, %v1395
        %v1399 = vclz %v1398
        %v1400 = vsub.s32 %v1399, 2
        %vm1401 = vcmp.gt.s32.totalorder 0, %v1400
        %v1402 = vsel %vm1401, 0, %v1400
        %v1403 = vsub.s32 32, %v1402
        %v1404 = vshll.u32 %v1395, %v1402
        %v1405 = vshrl.u32 %v1387, %v1403
        %v1406 = vor.u32 %v1404, %v1405
        %v1407 = vsub.s32 4294967266, %v1402
        %v1408 = vadd.s32 %v1407, 127
        %v1409 = vshll.u32 %v1408, 23
        %v1410 = vor.u32 4788187, %v1409
        %v1411 = vand.u32 2147483647, %v1410
        %v1413 = vcvt.s32.f32 %v1406
        %v1414 = vmul.f32 %v1413, %v1411
        %v1415 = vxor.u32 %v1414, 2147483648
        %v1416 = vsel %vm1295, %v1415, %v1414
        %v1417 = vsub.s32 4, %v1393
        %v1418 = vsel %vm1295, %v1417, %v1393
        %v1419 = vsel %vm1294, %v510, %v1416
        %v1420 = vsel %vm1294, 0, %v1418
        %v1421 = vmul.f32 %v1419, %v1419
        %v1422 = vmul.f32 %v1421, -0.001358992
        %v1423 = vadd.f32 %v1422, 0.041655596
        %v1424 = vmul.f32 %v1421, %v1423
        %v1425 = vadd.f32 %v1424, -0.4999988
        %v1426 = vmul.f32 %v1421, %v1425
        %v1427 = vadd.f32 1.0, %v1426
        %v1428 = vmul.f32 %v1419, %v1419
        %v1429 = vmul.f32 %v1428, -0.00019511016
        %v1430 = vadd.f32 %v1429, 0.008332121
        %v1431 = vmul.f32 %v1428, %v1430
        %v1432 = vadd.f32 %v1431, -0.16666654
        %v1433 = vmul.f32 %v1428, %v1432
        %v1434 = vadd.f32 %v1433, 1.0
        %v1435 = vmul.f32 %v1434, %v1419
        %vm1436 = vweird.f32 %v510
        %v1437 = vadd.s32 %v1420, 3
        %v1438 = vand.u32 %v1437, 3
        %vm1439 = vcmp.lt.s32.totalorder %v1438, 2
        %vm1440 = vcmp.eq.s32.totalorder %v1438, 0
        %v1441 = vxor.u32 %v1435, 2147483648
        %v1442 = vsel %vm1440, %v1427, %v1441
        %vm1443 = vcmp.eq.s32.totalorder %v1438, 2
        %v1444 = vxor.u32 %v1427, 2147483648
        %v1445 = vsel %vm1443, %v1444, %v1435
        %v1446 = vsel %vm1439, %v1442, %v1445
        %v1447 = vsel %vm1436, nan, %v1446
        %v1448 = vand.u32 2147483647, %v511
        %vm1449 = vcmp.le.f32.partialorder %v1448, 0.7853982
        %vm1450 = vcmp.lt.s32.totalorder %v511, 0
        %v1451 = vand.u32 %v511, 2139095040
        %v1452 = vshrl.u32 %v1451, 23
        %v1453 = vsub.s32 %v1452, 127
        %v1454 = vand.u32 2147483647, %v511
        %v1455 = vand.u32 %v1454, 8388607
        %v1456 = vor.u32 %v1455, 8388608
        %v1457 = vsub.s32 0, %v1456
        %v1458 = vadd.s32 %v1453, 1
        %vm1459 = vcmp.gt.s32.totalorder %v1458, 0
        %v1460 = vsel %vm1459, %v1458, 0
        %v1461 = vshrl.u32 %v1460, 5
        %v1462 = vand.u32 %v1460, 31
        %v1463 = vsub.s32 32, %v1462
        %v1464 = vshrl.u32 683565275, %v1463
        %v1465 = vshll.u32 683565275, %v1462
        %v1466 = vshrl.u32 2475754826, %v1463
        %v1467 = vor.u32 %v1465, %v1466
        %v1468 = vshll.u32 2475754826, %v1462
        %v1469 = vshrl.u32 2131351028, %v1463
        %v1470 = vor.u32 %v1468, %v1469
        %v1471 = vshll.u32 2131351028, %v1462
        %v1472 = vshrl.u32 2102212464, %v1463
        %v1473 = vor.u32 %v1471, %v1472
        %v1474 = vshll.u32 2102212464, %v1462
        %v1475 = vshrl.u32 920167782, %v1463
        %v1476 = vor.u32 %v1474, %v1475
        %v1477 = vshll.u32 920167782, %v1462
        %v1478 = vshrl.u32 1326507024, %v1463
        %v1479 = vor.u32 %v1477, %v1478
        %vm1480 = vcmp.lt.s32.totalorder %v1461, 1
        %vm1481 = vcmp.lt.s32.totalorder %v1461, 2
        %vm1482 = vcmp.lt.s32.totalorder %v1461, 3
        %vm1483 = vcmp.lt.s32.totalorder %v1461, 4
        %v1484 = vsel %vm1480, %v1464, %v1467
        %v1485 = vsel %vm1483, %v1473, 2102212464
        %v1486 = vsel %vm1482, %v1470, %v1485
        %v1487 = vsel %vm1481, %v1484, %v1486
        %v1488 = vsel %vm1480, %v1467, %v1470
        %v1489 = vsel %vm1483, %v1476, 920167782
        %v1490 = vsel %vm1482, %v1473, %v1489
        %v1491 = vsel %vm1481, %v1488, %v1490
        %v1492 = vsel %vm1480, %v1470, %v1473
        %v1493 = vsel %vm1483, %v1479, 1326507024
        %v1494 = vsel %vm1482, %v1476, %v1493
        %v1495 = vsel %vm1481, %v1492, %v1494
        %v1496 = vshll.u32 %v1456, 8
        %v1497 = vand.u32 %v1496, 65535
        %v1498 = vshrl.u32 %v1496, 16
        %v1499 = vand.u32 %v1495, 65535
        %v1500 = vshrl.u32 %v1495, 16
        %v1501 = vmul.u32 %v1497, %v1499
        %v1502 = vmul.u32 %v1497, %v1500
        %v1503 = vmul.u32 %v1498, %v1499
        %v1504 = vmul.u32 %v1498, %v1500
        %v1505 = vshll.u32 %v1502, 16
        %v1506 = vshrl.u32 %v1502, 16
        %v1507 = vshll.u32 %v1503, 16
        %v1508 = vshrl.u32 %v1503, 16
        %vm1509 = vc.u32 %v1501, %v1505
        %v1510 = vsel %vm1509, 1, 0
        %v1511 = vadd.s32 %v1501, %v1505
        %v1512 = vadd.s32 %v1504, %v1510
        %vm1513 = vc.u32 %v1511, %v1507
        %v1514 = vsel %vm1513, 1, 0
        %v1515 = vadd.s32 %v1511, %v1507
        %v1516 = vadd.s32 %v1512, %v1514
        %v1517 = vadd.s32 %v1516, %v1506
        %v1518 = vadd.s32 %v1517, %v1508
        %v1519 = vand.u32 %v1496, 65535
        %v1520 = vshrl.u32 %v1496, 16
        %v1521 = vand.u32 %v1491, 65535
        %v1522 = vshrl.u32 %v1491, 16
        %v1523 = vmul.u32 %v1519, %v1521
        %v1524 = vmul.u32 %v1519, %v1522
        %v1525 = vmul.u32 %v1520, %v1521
        %v1526 = vmul.u32 %v1520, %v1522
        %v1527 = vshll.u32 %v1524, 16
        %v1528 = vshrl.u32 %v1524, 16
        %v1529 = vshll.u32 %v1525, 16
        %v1530 = vshrl.u32 %v1525, 16
        %vm1531 = vc.u32 %v1523, %v1527
        %v1532 = vsel %vm1531, 1, 0
        %v1533 = vadd.s32 %v1523, %v1527
        %v1534 = vadd.s32 %v1526, %v1532
        %vm1535 = vc.u32 %v1533, %v1529
        %v1536 = vsel %vm1535, 1, 0
        %v1537 = vadd.s32 %v1533, %v1529
        %v1538 = vadd.s32 %v1534, %v1536
        %v1539 = vadd.s32 %v1538, %v1528
        %v1540 = vadd.s32 %v1539, %v1530
        %v1541 = vmul.u32 %v1496, %v1487
        %v1542 = vadd.s32 %v1518, %v1537
        %vm1543 = vc.u32 %v1518, %v1537
        %v1544 = vadd.s32 %v1540, 1
        %v1545 = vsel %vm1543, %v1544, %v1540
        %v1546 = vadd.s32 %v1541, %v1545
        %v1547 = vadd.s32 %v1546, 536870912
        %v1548 = vshrl.u32 %v1547, 30
        %v1549 = vshll.u32 %v1548, 30
        %v1550 = vsub.s32 %v1546, %v1549
        %vm1551 = vcmp.lt.s32.totalorder %v1550, 0
        %v1552 = vsub.s32 0, %v1550
        %v1553 = vsel %vm1551, %v1552, %v1550
        %v1554 = vclz %v1553
        %v1555 = vsub.s32 %v1554, 2
        %vm1556 = vcmp.gt.s32.totalorder 0, %v1555
        %v1557 = vsel %vm1556, 0, %v1555
        %v1558 = vsub.s32 32, %v1557
        %v1559 = vshll.u32 %v1550, %v1557
        %v1560 = vshrl.u32 %v1542, %v1558
        %v1561 = vor.u32 %v1559, %v1560
        %v1562 = vsub.s32 4294967266, %v1557
        %v1563 = vadd.s32 %v1562, 127
        %v1564 = vshll.u32 %v1563, 23
        %v1565 = vor.u32 4788187, %v1564
        %v1566 = vand.u32 2147483647, %v1565
        %v1568 = vcvt.s32.f32 %v1561
        %v1569 = vmul.f32 %v1568, %v1566
        %v1570 = vxor.u32 %v1569, 2147483648
        %v1571 = vsel %vm1450, %v1570, %v1569
        %v1572 = vsub.s32 4, %v1548
        %v1573 = vsel %vm1450, %v1572, %v1548
        %v1574 = vsel %vm1449, %v511, %v1571
        %v1575 = vsel %vm1449, 0, %v1573
        %v1576 = vmul.f32 %v1574, %v1574
        %v1577 = vmul.f32 %v1576, -0.001358992
        %v1578 = vadd.f32 %v1577, 0.041655596
        %v1579 = vmul.f32 %v1576, %v1578
        %v1580 = vadd.f32 %v1579, -0.4999988
        %v1581 = vmul.f32 %v1576, %v1580
        %v1582 = vadd.f32 1.0, %v1581
        %v1583 = vmul.f32 %v1574, %v1574
        %v1584 = vmul.f32 %v1583, -0.00019511016
        %v1585 = vadd.f32 %v1584, 0.008332121
        %v1586 = vmul.f32 %v1583, %v1585
        %v1587 = vadd.f32 %v1586, -0.16666654
        %v1588 = vmul.f32 %v1583, %v1587
        %v1589 = vadd.f32 %v1588, 1.0
        %v1590 = vmul.f32 %v1589, %v1574
        %vm1591 = vweird.f32 %v511
        %v1592 = vadd.s32 %v1575, 3
        %v1593 = vand.u32 %v1592, 3
        %vm1594 = vcmp.lt.s32.totalorder %v1593, 2
        %vm1595 = vcmp.eq.s32.totalorder %v1593, 0
        %v1596 = vxor.u32 %v1590, 2147483648
        %v1597 = vsel %vm1595, %v1582, %v1596
        %vm1598 = vcmp.eq.s32.totalorder %v1593, 2
        %v1599 = vxor.u32 %v1582, 2147483648
        %v1600 = vsel %vm1598, %v1599, %v1590
        %v1601 = vsel %vm1594, %v1597, %v1600
        %v1602 = vsel %vm1591, nan, %v1601
        %v1603 = vand.u32 2147483647, %v512
        %vm1604 = vcmp.le.f32.partialorder %v1603, 0.7853982
        %vm1605 = vcmp.lt.s32.totalorder %v512, 0
        %v1606 = vand.u32 %v512, 2139095040
        %v1607 = vshrl.u32 %v1606, 23
        %v1608 = vsub.s32 %v1607, 127
        %v1609 = vand.u32 2147483647, %v512
        %v1610 = vand.u32 %v1609, 8388607
        %v1611 = vor.u32 %v1610, 8388608
        %v1612 = vsub.s32 0, %v1611
        %v1613 = vadd.s32 %v1608, 1
        %vm1614 = vcmp.gt.s32.totalorder %v1613, 0
        %v1615 = vsel %vm1614, %v1613, 0
        %v1616 = vshrl.u32 %v1615, 5
        %v1617 = vand.u32 %v1615, 31
        %v1618 = vsub.s32 32, %v1617
        %v1619 = vshrl.u32 683565275, %v1618
        %v1620 = vshll.u32 683565275, %v1617
        %v1621 = vshrl.u32 2475754826, %v1618
        %v1622 = vor.u32 %v1620, %v1621
        %v1623 = vshll.u32 2475754826, %v1617
        %v1624 = vshrl.u32 2131351028, %v1618
        %v1625 = vor.u32 %v1623, %v1624
        %v1626 = vshll.u32 2131351028, %v1617
        %v1627 = vshrl.u32 2102212464, %v1618
        %v1628 = vor.u32 %v1626, %v1627
        %v1629 = vshll.u32 2102212464, %v1617
        %v1630 = vshrl.u32 920167782, %v1618
        %v1631 = vor.u32 %v1629, %v1630
        %v1632 = vshll.u32 920167782, %v1617
        %v1633 = vshrl.u32 1326507024, %v1618
        %v1634 = vor.u32 %v1632, %v1633
        %vm1635 = vcmp.lt.s32.totalorder %v1616, 1
        %vm1636 = vcmp.lt.s32.totalorder %v1616, 2
        %vm1637 = vcmp.lt.s32.totalorder %v1616, 3
        %vm1638 = vcmp.lt.s32.totalorder %v1616, 4
        %v1639 = vsel %vm1635, %v1619, %v1622
        %v1640 = vsel %vm1638, %v1628, 2102212464
        %v1641 = vsel %vm1637, %v1625, %v1640
        %v1642 = vsel %vm1636, %v1639, %v1641
        %v1643 = vsel %vm1635, %v1622, %v1625
        %v1644 = vsel %vm1638, %v1631, 920167782
        %v1645 = vsel %vm1637, %v1628, %v1644
        %v1646 = vsel %vm1636, %v1643, %v1645
        %v1647 = vsel %vm1635, %v1625, %v1628
        %v1648 = vsel %vm1638, %v1634, 1326507024
        %v1649 = vsel %vm1637, %v1631, %v1648
        %v1650 = vsel %vm1636, %v1647, %v1649
        %v1651 = vshll.u32 %v1611, 8
        %v1652 = vand.u32 %v1651, 65535
        %v1653 = vshrl.u32 %v1651, 16
        %v1654 = vand.u32 %v1650, 65535
        %v1655 = vshrl.u32 %v1650, 16
        %v1656 = vmul.u32 %v1652, %v1654
        %v1657 = vmul.u32 %v1652, %v1655
        %v1658 = vmul.u32 %v1653, %v1654
        %v1659 = vmul.u32 %v1653, %v1655
        %v1660 = vshll.u32 %v1657, 16
        %v1661 = vshrl.u32 %v1657, 16
        %v1662 = vshll.u32 %v1658, 16
        %v1663 = vshrl.u32 %v1658, 16
        %vm1664 = vc.u32 %v1656, %v1660
        %v1665 = vsel %vm1664, 1, 0
        %v1666 = vadd.s32 %v1656, %v1660
        %v1667 = vadd.s32 %v1659, %v1665
        %vm1668 = vc.u32 %v1666, %v1662
        %v1669 = vsel %vm1668, 1, 0
        %v1670 = vadd.s32 %v1666, %v1662
        %v1671 = vadd.s32 %v1667, %v1669
        %v1672 = vadd.s32 %v1671, %v1661
        %v1673 = vadd.s32 %v1672, %v1663
        %v1674 = vand.u32 %v1651, 65535
        %v1675 = vshrl.u32 %v1651, 16
        %v1676 = vand.u32 %v1646, 65535
        %v1677 = vshrl.u32 %v1646, 16
        %v1678 = vmul.u32 %v1674, %v1676
        %v1679 = vmul.u32 %v1674, %v1677
        %v1680 = vmul.u32 %v1675, %v1676
        %v1681 = vmul.u32 %v1675, %v1677
        %v1682 = vshll.u32 %v1679, 16
        %v1683 = vshrl.u32 %v1679, 16
        %v1684 = vshll.u32 %v1680, 16
        %v1685 = vshrl.u32 %v1680, 16
        %vm1686 = vc.u32 %v1678, %v1682
        %v1687 = vsel %vm1686, 1, 0
        %v1688 = vadd.s32 %v1678, %v1682
        %v1689 = vadd.s32 %v1681, %v1687
        %vm1690 = vc.u32 %v1688, %v1684
        %v1691 = vsel %vm1690, 1, 0
        %v1692 = vadd.s32 %v1688, %v1684
        %v1693 = vadd.s32 %v1689, %v1691
        %v1694 = vadd.s32 %v1693, %v1683
        %v1695 = vadd.s32 %v1694, %v1685
        %v1696 = vmul.u32 %v1651, %v1642
        %v1697 = vadd.s32 %v1673, %v1692
        %vm1698 = vc.u32 %v1673, %v1692
        %v1699 = vadd.s32 %v1695, 1
        %v1700 = vsel %vm1698, %v1699, %v1695
        %v1701 = vadd.s32 %v1696, %v1700
        %v1702 = vadd.s32 %v1701, 536870912
        %v1703 = vshrl.u32 %v1702, 30
        %v1704 = vshll.u32 %v1703, 30
        %v1705 = vsub.s32 %v1701, %v1704
        %vm1706 = vcmp.lt.s32.totalorder %v1705, 0
        %v1707 = vsub.s32 0, %v1705
        %v1708 = vsel %vm1706, %v1707, %v1705
        %v1709 = vclz %v1708
        %v1710 = vsub.s32 %v1709, 2
        %vm1711 = vcmp.gt.s32.totalorder 0, %v1710
        %v1712 = vsel %vm1711, 0, %v1710
        %v1713 = vsub.s32 32, %v1712
        %v1714 = vshll.u32 %v1705, %v1712
        %v1715 = vshrl.u32 %v1697, %v1713
        %v1716 = vor.u32 %v1714, %v1715
        %v1717 = vsub.s32 4294967266, %v1712
        %v1718 = vadd.s32 %v1717, 127
        %v1719 = vshll.u32 %v1718, 23
        %v1720 = vor.u32 4788187, %v1719
        %v1721 = vand.u32 2147483647, %v1720
        %v1723 = vcvt.s32.f32 %v1716
        %v1724 = vmul.f32 %v1723, %v1721
        %v1725 = vxor.u32 %v1724, 2147483648
        %v1726 = vsel %vm1605, %v1725, %v1724
        %v1727 = vsub.s32 4, %v1703
        %v1728 = vsel %vm1605, %v1727, %v1703
        %v1729 = vsel %vm1604, %v512, %v1726
        %v1730 = vsel %vm1604, 0, %v1728
        %v1731 = vmul.f32 %v1729, %v1729
        %v1732 = vmul.f32 %v1731, -0.001358992
        %v1733 = vadd.f32 %v1732, 0.041655596
        %v1734 = vmul.f32 %v1731, %v1733
        %v1735 = vadd.f32 %v1734, -0.4999988
        %v1736 = vmul.f32 %v1731, %v1735
        %v1737 = vadd.f32 1.0, %v1736
        %v1738 = vmul.f32 %v1729, %v1729
        %v1739 = vmul.f32 %v1738, -0.00019511016
        %v1740 = vadd.f32 %v1739, 0.008332121
        %v1741 = vmul.f32 %v1738, %v1740
        %v1742 = vadd.f32 %v1741, -0.16666654
        %v1743 = vmul.f32 %v1738, %v1742
        %v1744 = vadd.f32 %v1743, 1.0
        %v1745 = vmul.f32 %v1744, %v1729
        %vm1746 = vweird.f32 %v512
        %v1747 = vadd.s32 %v1730, 3
        %v1748 = vand.u32 %v1747, 3
        %vm1749 = vcmp.lt.s32.totalorder %v1748, 2
        %vm1750 = vcmp.eq.s32.totalorder %v1748, 0
        %v1751 = vxor.u32 %v1745, 2147483648
        %v1752 = vsel %vm1750, %v1737, %v1751
        %vm1753 = vcmp.eq.s32.totalorder %v1748, 2
        %v1754 = vxor.u32 %v1737, 2147483648
        %v1755 = vsel %vm1753, %v1754, %v1745
        %v1756 = vsel %vm1749, %v1752, %v1755
        %v1757 = vsel %vm1746, nan, %v1756
        %v1758 = vand.u32 2147483647, %v513
        %vm1759 = vcmp.le.f32.partialorder %v1758, 0.7853982
        %vm1760 = vcmp.lt.s32.totalorder %v513, 0
        %v1761 = vand.u32 %v513, 2139095040
        %v1762 = vshrl.u32 %v1761, 23
        %v1763 = vsub.s32 %v1762, 127
        %v1764 = vand.u32 2147483647, %v513
        %v1765 = vand.u32 %v1764, 8388607
        %v1766 = vor.u32 %v1765, 8388608
        %v1767 = vsub.s32 0, %v1766
        %v1768 = vadd.s32 %v1763, 1
        %vm1769 = vcmp.gt.s32.totalorder %v1768, 0
        %v1770 = vsel %vm1769, %v1768, 0
        %v1771 = vshrl.u32 %v1770, 5
        %v1772 = vand.u32 %v1770, 31
        %v1773 = vsub.s32 32, %v1772
        %v1774 = vshrl.u32 683565275, %v1773
        %v1775 = vshll.u32 683565275, %v1772
        %v1776 = vshrl.u32 2475754826, %v1773
        %v1777 = vor.u32 %v1775, %v1776
        %v1778 = vshll.u32 2475754826, %v1772
        %v1779 = vshrl.u32 2131351028, %v1773
        %v1780 = vor.u32 %v1778, %v1779
        %v1781 = vshll.u32 2131351028, %v1772
        %v1782 = vshrl.u32 2102212464, %v1773
        %v1783 = vor.u32 %v1781, %v1782
        %v1784 = vshll.u32 2102212464, %v1772
        %v1785 = vshrl.u32 920167782, %v1773
        %v1786 = vor.u32 %v1784, %v1785
        %v1787 = vshll.u32 920167782, %v1772
        %v1788 = vshrl.u32 1326507024, %v1773
        %v1789 = vor.u32 %v1787, %v1788
        %vm1790 = vcmp.lt.s32.totalorder %v1771, 1
        %vm1791 = vcmp.lt.s32.totalorder %v1771, 2
        %vm1792 = vcmp.lt.s32.totalorder %v1771, 3
        %vm1793 = vcmp.lt.s32.totalorder %v1771, 4
        %v1794 = vsel %vm1790, %v1774, %v1777
        %v1795 = vsel %vm1793, %v1783, 2102212464
        %v1796 = vsel %vm1792, %v1780, %v1795
        %v1797 = vsel %vm1791, %v1794, %v1796
        %v1798 = vsel %vm1790, %v1777, %v1780
        %v1799 = vsel %vm1793, %v1786, 920167782
        %v1800 = vsel %vm1792, %v1783, %v1799
        %v1801 = vsel %vm1791, %v1798, %v1800
        %v1802 = vsel %vm1790, %v1780, %v1783
        %v1803 = vsel %vm1793, %v1789, 1326507024
        %v1804 = vsel %vm1792, %v1786, %v1803
        %v1805 = vsel %vm1791, %v1802, %v1804
        %v1806 = vshll.u32 %v1766, 8
        %v1807 = vand.u32 %v1806, 65535
        %v1808 = vshrl.u32 %v1806, 16
        %v1809 = vand.u32 %v1805, 65535
        %v1810 = vshrl.u32 %v1805, 16
        %v1811 = vmul.u32 %v1807, %v1809
        %v1812 = vmul.u32 %v1807, %v1810
        %v1813 = vmul.u32 %v1808, %v1809
        %v1814 = vmul.u32 %v1808, %v1810
        %v1815 = vshll.u32 %v1812, 16
        %v1816 = vshrl.u32 %v1812, 16
        %v1817 = vshll.u32 %v1813, 16
        %v1818 = vshrl.u32 %v1813, 16
        %vm1819 = vc.u32 %v1811, %v1815
        %v1820 = vsel %vm1819, 1, 0
        %v1821 = vadd.s32 %v1811, %v1815
        %v1822 = vadd.s32 %v1814, %v1820
        %vm1823 = vc.u32 %v1821, %v1817
        %v1824 = vsel %vm1823, 1, 0
        %v1825 = vadd.s32 %v1821, %v1817
        %v1826 = vadd.s32 %v1822, %v1824
        %v1827 = vadd.s32 %v1826, %v1816
        %v1828 = vadd.s32 %v1827, %v1818
        %v1829 = vand.u32 %v1806, 65535
        %v1830 = vshrl.u32 %v1806, 16
        %v1831 = vand.u32 %v1801, 65535
        %v1832 = vshrl.u32 %v1801, 16
        %v1833 = vmul.u32 %v1829, %v1831
        %v1834 = vmul.u32 %v1829, %v1832
        %v1835 = vmul.u32 %v1830, %v1831
        %v1836 = vmul.u32 %v1830, %v1832
        %v1837 = vshll.u32 %v1834, 16
        %v1838 = vshrl.u32 %v1834, 16
        %v1839 = vshll.u32 %v1835, 16
        %v1840 = vshrl.u32 %v1835, 16
        %vm1841 = vc.u32 %v1833, %v1837
        %v1842 = vsel %vm1841, 1, 0
        %v1843 = vadd.s32 %v1833, %v1837
        %v1844 = vadd.s32 %v1836, %v1842
        %vm1845 = vc.u32 %v1843, %v1839
        %v1846 = vsel %vm1845, 1, 0
        %v1847 = vadd.s32 %v1843, %v1839
        %v1848 = vadd.s32 %v1844, %v1846
        %v1849 = vadd.s32 %v1848, %v1838
        %v1850 = vadd.s32 %v1849, %v1840
        %v1851 = vmul.u32 %v1806, %v1797
        %v1852 = vadd.s32 %v1828, %v1847
        %vm1853 = vc.u32 %v1828, %v1847
        %v1854 = vadd.s32 %v1850, 1
        %v1855 = vsel %vm1853, %v1854, %v1850
        %v1856 = vadd.s32 %v1851, %v1855
        %v1857 = vadd.s32 %v1856, 536870912
        %v1858 = vshrl.u32 %v1857, 30
        %v1859 = vshll.u32 %v1858, 30
        %v1860 = vsub.s32 %v1856, %v1859
        %vm1861 = vcmp.lt.s32.totalorder %v1860, 0
        %v1862 = vsub.s32 0, %v1860
        %v1863 = vsel %vm1861, %v1862, %v1860
        %v1864 = vclz %v1863
        %v1865 = vsub.s32 %v1864, 2
        %vm1866 = vcmp.gt.s32.totalorder 0, %v1865
        %v1867 = vsel %vm1866, 0, %v1865
        %v1868 = vsub.s32 32, %v1867
        %v1869 = vshll.u32 %v1860, %v1867
        %v1870 = vshrl.u32 %v1852, %v1868
        %v1871 = vor.u32 %v1869, %v1870
        %v1872 = vsub.s32 4294967266, %v1867
        %v1873 = vadd.s32 %v1872, 127
        %v1874 = vshll.u32 %v1873, 23
        %v1875 = vor.u32 4788187, %v1874
        %v1876 = vand.u32 2147483647, %v1875
        %v1878 = vcvt.s32.f32 %v1871
        %v1879 = vmul.f32 %v1878, %v1876
        %v1880 = vxor.u32 %v1879, 2147483648
        %v1881 = vsel %vm1760, %v1880, %v1879
        %v1882 = vsub.s32 4, %v1858
        %v1883 = vsel %vm1760, %v1882, %v1858
        %v1884 = vsel %vm1759, %v513, %v1881
        %v1885 = vsel %vm1759, 0, %v1883
        %v1886 = vmul.f32 %v1884, %v1884
        %v1887 = vmul.f32 %v1886, -0.001358992
        %v1888 = vadd.f32 %v1887, 0.041655596
        %v1889 = vmul.f32 %v1886, %v1888
        %v1890 = vadd.f32 %v1889, -0.4999988
        %v1891 = vmul.f32 %v1886, %v1890
        %v1892 = vadd.f32 1.0, %v1891
        %v1893 = vmul.f32 %v1884, %v1884
        %v1894 = vmul.f32 %v1893, -0.00019511016
        %v1895 = vadd.f32 %v1894, 0.008332121
        %v1896 = vmul.f32 %v1893, %v1895
        %v1897 = vadd.f32 %v1896, -0.16666654
        %v1898 = vmul.f32 %v1893, %v1897
        %v1899 = vadd.f32 %v1898, 1.0
        %v1900 = vmul.f32 %v1899, %v1884
        %vm1901 = vweird.f32 %v513
        %v1902 = vadd.s32 %v1885, 3
        %v1903 = vand.u32 %v1902, 3
        %vm1904 = vcmp.lt.s32.totalorder %v1903, 2
        %vm1905 = vcmp.eq.s32.totalorder %v1903, 0
        %v1906 = vxor.u32 %v1900, 2147483648
        %v1907 = vsel %vm1905, %v1892, %v1906
        %vm1908 = vcmp.eq.s32.totalorder %v1903, 2
        %v1909 = vxor.u32 %v1892, 2147483648
        %v1910 = vsel %vm1908, %v1909, %v1900
        %v1911 = vsel %vm1904, %v1907, %v1910
        %v1912 = vsel %vm1901, nan, %v1911
        %v1913 = vand.u32 2147483647, %v514
        %vm1914 = vcmp.le.f32.partialorder %v1913, 0.7853982
        %vm1915 = vcmp.lt.s32.totalorder %v514, 0
        %v1916 = vand.u32 %v514, 2139095040
        %v1917 = vshrl.u32 %v1916, 23
        %v1918 = vsub.s32 %v1917, 127
        %v1919 = vand.u32 2147483647, %v514
        %v1920 = vand.u32 %v1919, 8388607
        %v1921 = vor.u32 %v1920, 8388608
        %v1922 = vsub.s32 0, %v1921
        %v1923 = vadd.s32 %v1918, 1
        %vm1924 = vcmp.gt.s32.totalorder %v1923, 0
        %v1925 = vsel %vm1924, %v1923, 0
        %v1926 = vshrl.u32 %v1925, 5
        %v1927 = vand.u32 %v1925, 31
        %v1928 = vsub.s32 32, %v1927
        %v1929 = vshrl.u32 683565275, %v1928
        %v1930 = vshll.u32 683565275, %v1927
        %v1931 = vshrl.u32 2475754826, %v1928
        %v1932 = vor.u32 %v1930, %v1931
        %v1933 = vshll.u32 2475754826, %v1927
        %v1934 = vshrl.u32 2131351028, %v1928
        %v1935 = vor.u32 %v1933, %v1934
        %v1936 = vshll.u32 2131351028, %v1927
        %v1937 = vshrl.u32 2102212464, %v1928
        %v1938 = vor.u32 %v1936, %v1937
        %v1939 = vshll.u32 2102212464, %v1927
        %v1940 = vshrl.u32 920167782, %v1928
        %v1941 = vor.u32 %v1939, %v1940
        %v1942 = vshll.u32 920167782, %v1927
        %v1943 = vshrl.u32 1326507024, %v1928
        %v1944 = vor.u32 %v1942, %v1943
        %vm1945 = vcmp.lt.s32.totalorder %v1926, 1
        %vm1946 = vcmp.lt.s32.totalorder %v1926, 2
        %vm1947 = vcmp.lt.s32.totalorder %v1926, 3
        %vm1948 = vcmp.lt.s32.totalorder %v1926, 4
        %v1949 = vsel %vm1945, %v1929, %v1932
        %v1950 = vsel %vm1948, %v1938, 2102212464
        %v1951 = vsel %vm1947, %v1935, %v1950
        %v1952 = vsel %vm1946, %v1949, %v1951
        %v1953 = vsel %vm1945, %v1932, %v1935
        %v1954 = vsel %vm1948, %v1941, 920167782
        %v1955 = vsel %vm1947, %v1938, %v1954
        %v1956 = vsel %vm1946, %v1953, %v1955
        %v1957 = vsel %vm1945, %v1935, %v1938
        %v1958 = vsel %vm1948, %v1944, 1326507024
        %v1959 = vsel %vm1947, %v1941, %v1958
        %v1960 = vsel %vm1946, %v1957, %v1959
        %v1961 = vshll.u32 %v1921, 8
        %v1962 = vand.u32 %v1961, 65535
        %v1963 = vshrl.u32 %v1961, 16
        %v1964 = vand.u32 %v1960, 65535
        %v1965 = vshrl.u32 %v1960, 16
        %v1966 = vmul.u32 %v1962, %v1964
        %v1967 = vmul.u32 %v1962, %v1965
        %v1968 = vmul.u32 %v1963, %v1964
        %v1969 = vmul.u32 %v1963, %v1965
        %v1970 = vshll.u32 %v1967, 16
        %v1971 = vshrl.u32 %v1967, 16
        %v1972 = vshll.u32 %v1968, 16
        %v1973 = vshrl.u32 %v1968, 16
        %vm1974 = vc.u32 %v1966, %v1970
        %v1975 = vsel %vm1974, 1, 0
        %v1976 = vadd.s32 %v1966, %v1970
        %v1977 = vadd.s32 %v1969, %v1975
        %vm1978 = vc.u32 %v1976, %v1972
        %v1979 = vsel %vm1978, 1, 0
        %v1980 = vadd.s32 %v1976, %v1972
        %v1981 = vadd.s32 %v1977, %v1979
        %v1982 = vadd.s32 %v1981, %v1971
        %v1983 = vadd.s32 %v1982, %v1973
        %v1984 = vand.u32 %v1961, 65535
        %v1985 = vshrl.u32 %v1961, 16
        %v1986 = vand.u32 %v1956, 65535
        %v1987 = vshrl.u32 %v1956, 16
        %v1988 = vmul.u32 %v1984, %v1986
        %v1989 = vmul.u32 %v1984, %v1987
        %v1990 = vmul.u32 %v1985, %v1986
        %v1991 = vmul.u32 %v1985, %v1987
        %v1992 = vshll.u32 %v1989, 16
        %v1993 = vshrl.u32 %v1989, 16
        %v1994 = vshll.u32 %v1990, 16
        %v1995 = vshrl.u32 %v1990, 16
        %vm1996 = vc.u32 %v1988, %v1992
        %v1997 = vsel %vm1996, 1, 0
        %v1998 = vadd.s32 %v1988, %v1992
        %v1999 = vadd.s32 %v1991, %v1997
        %vm2000 = vc.u32 %v1998, %v1994
        %v2001 = vsel %vm2000, 1, 0
        %v2002 = vadd.s32 %v1998, %v1994
        %v2003 = vadd.s32 %v1999, %v2001
        %v2004 = vadd.s32 %v2003, %v1993
        %v2005 = vadd.s32 %v2004, %v1995
        %v2006 = vmul.u32 %v1961, %v1952
        %v2007 = vadd.s32 %v1983, %v2002
        %vm2008 = vc.u32 %v1983, %v2002
        %v2009 = vadd.s32 %v2005, 1
        %v2010 = vsel %vm2008, %v2009, %v2005
        %v2011 = vadd.s32 %v2006, %v2010
        %v2012 = vadd.s32 %v2011, 536870912
        %v2013 = vshrl.u32 %v2012, 30
        %v2014 = vshll.u32 %v2013, 30
        %v2015 = vsub.s32 %v2011, %v2014
        %vm2016 = vcmp.lt.s32.totalorder %v2015, 0
        %v2017 = vsub.s32 0, %v2015
        %v2018 = vsel %vm2016, %v2017, %v2015
        %v2019 = vclz %v2018
        %v2020 = vsub.s32 %v2019, 2
        %vm2021 = vcmp.gt.s32.totalorder 0, %v2020
        %v2022 = vsel %vm2021, 0, %v2020
        %v2023 = vsub.s32 32, %v2022
        %v2024 = vshll.u32 %v2015, %v2022
        %v2025 = vshrl.u32 %v2007, %v2023
        %v2026 = vor.u32 %v2024, %v2025
        %v2027 = vsub.s32 4294967266, %v2022
        %v2028 = vadd.s32 %v2027, 127
        %v2029 = vshll.u32 %v2028, 23
        %v2030 = vor.u32 4788187, %v2029
        %v2031 = vand.u32 2147483647, %v2030
        %v2033 = vcvt.s32.f32 %v2026
        %v2034 = vmul.f32 %v2033, %v2031
        %v2035 = vxor.u32 %v2034, 2147483648
        %v2036 = vsel %vm1915, %v2035, %v2034
        %v2037 = vsub.s32 4, %v2013
        %v2038 = vsel %vm1915, %v2037, %v2013
        %v2039 = vsel %vm1914, %v514, %v2036
        %v2040 = vsel %vm1914, 0, %v2038
        %v2041 = vmul.f32 %v2039, %v2039
        %v2042 = vmul.f32 %v2041, -0.001358992
        %v2043 = vadd.f32 %v2042, 0.041655596
        %v2044 = vmul.f32 %v2041, %v2043
        %v2045 = vadd.f32 %v2044, -0.4999988
        %v2046 = vmul.f32 %v2041, %v2045
        %v2047 = vadd.f32 1.0, %v2046
        %v2048 = vmul.f32 %v2039, %v2039
        %v2049 = vmul.f32 %v2048, -0.00019511016
        %v2050 = vadd.f32 %v2049, 0.008332121
        %v2051 = vmul.f32 %v2048, %v2050
        %v2052 = vadd.f32 %v2051, -0.16666654
        %v2053 = vmul.f32 %v2048, %v2052
        %v2054 = vadd.f32 %v2053, 1.0
        %v2055 = vmul.f32 %v2054, %v2039
        %vm2056 = vweird.f32 %v514
        %v2057 = vadd.s32 %v2040, 3
        %v2058 = vand.u32 %v2057, 3
        %vm2059 = vcmp.lt.s32.totalorder %v2058, 2
        %vm2060 = vcmp.eq.s32.totalorder %v2058, 0
        %v2061 = vxor.u32 %v2055, 2147483648
        %v2062 = vsel %vm2060, %v2047, %v2061
        %vm2063 = vcmp.eq.s32.totalorder %v2058, 2
        %v2064 = vxor.u32 %v2047, 2147483648
        %v2065 = vsel %vm2063, %v2064, %v2055
        %v2066 = vsel %vm2059, %v2062, %v2065
        %v2067 = vsel %vm2056, nan, %v2066
        %v2068 = vand.u32 2147483647, %v515
        %vm2069 = vcmp.le.f32.partialorder %v2068, 0.7853982
        %vm2070 = vcmp.lt.s32.totalorder %v515, 0
        %v2071 = vand.u32 %v515, 2139095040
        %v2072 = vshrl.u32 %v2071, 23
        %v2073 = vsub.s32 %v2072, 127
        %v2074 = vand.u32 2147483647, %v515
        %v2075 = vand.u32 %v2074, 8388607
        %v2076 = vor.u32 %v2075, 8388608
        %v2077 = vsub.s32 0, %v2076
        %v2078 = vadd.s32 %v2073, 1
        %vm2079 = vcmp.gt.s32.totalorder %v2078, 0
        %v2080 = vsel %vm2079, %v2078, 0
        %v2081 = vshrl.u32 %v2080, 5
        %v2082 = vand.u32 %v2080, 31
        %v2083 = vsub.s32 32, %v2082
        %v2084 = vshrl.u32 683565275, %v2083
        %v2085 = vshll.u32 683565275, %v2082
        %v2086 = vshrl.u32 2475754826, %v2083
        %v2087 = vor.u32 %v2085, %v2086
        %v2088 = vshll.u32 2475754826, %v2082
        %v2089 = vshrl.u32 2131351028, %v2083
        %v2090 = vor.u32 %v2088, %v2089
        %v2091 = vshll.u32 2131351028, %v2082
        %v2092 = vshrl.u32 2102212464, %v2083
        %v2093 = vor.u32 %v2091, %v2092
        %v2094 = vshll.u32 2102212464, %v2082
        %v2095 = vshrl.u32 920167782, %v2083
        %v2096 = vor.u32 %v2094, %v2095
        %v2097 = vshll.u32 920167782, %v2082
        %v2098 = vshrl.u32 1326507024, %v2083
        %v2099 = vor.u32 %v2097, %v2098
        %vm2100 = vcmp.lt.s32.totalorder %v2081, 1
        %vm2101 = vcmp.lt.s32.totalorder %v2081, 2
        %vm2102 = vcmp.lt.s32.totalorder %v2081, 3
        %vm2103 = vcmp.lt.s32.totalorder %v2081, 4
        %v2104 = vsel %vm2100, %v2084, %v2087
        %v2105 = vsel %vm2103, %v2093, 2102212464
        %v2106 = vsel %vm2102, %v2090, %v2105
        %v2107 = vsel %vm2101, %v2104, %v2106
        %v2108 = vsel %vm2100, %v2087, %v2090
        %v2109 = vsel %vm2103, %v2096, 920167782
        %v2110 = vsel %vm2102, %v2093, %v2109
        %v2111 = vsel %vm2101, %v2108, %v2110
        %v2112 = vsel %vm2100, %v2090, %v2093
        %v2113 = vsel %vm2103, %v2099, 1326507024
        %v2114 = vsel %vm2102, %v2096, %v2113
        %v2115 = vsel %vm2101, %v2112, %v2114
        %v2116 = vshll.u32 %v2076, 8
        %v2117 = vand.u32 %v2116, 65535
        %v2118 = vshrl.u32 %v2116, 16
        %v2119 = vand.u32 %v2115, 65535
        %v2120 = vshrl.u32 %v2115, 16
        %v2121 = vmul.u32 %v2117, %v2119
        %v2122 = vmul.u32 %v2117, %v2120
        %v2123 = vmul.u32 %v2118, %v2119
        %v2124 = vmul.u32 %v2118, %v2120
        %v2125 = vshll.u32 %v2122, 16
        %v2126 = vshrl.u32 %v2122, 16
        %v2127 = vshll.u32 %v2123, 16
        %v2128 = vshrl.u32 %v2123, 16
        %vm2129 = vc.u32 %v2121, %v2125
        %v2130 = vsel %vm2129, 1, 0
        %v2131 = vadd.s32 %v2121, %v2125
        %v2132 = vadd.s32 %v2124, %v2130
        %vm2133 = vc.u32 %v2131, %v2127
        %v2134 = vsel %vm2133, 1, 0
        %v2135 = vadd.s32 %v2131, %v2127
        %v2136 = vadd.s32 %v2132, %v2134
        %v2137 = vadd.s32 %v2136, %v2126
        %v2138 = vadd.s32 %v2137, %v2128
        %v2139 = vand.u32 %v2116, 65535
        %v2140 = vshrl.u32 %v2116, 16
        %v2141 = vand.u32 %v2111, 65535
        %v2142 = vshrl.u32 %v2111, 16
        %v2143 = vmul.u32 %v2139, %v2141
        %v2144 = vmul.u32 %v2139, %v2142
        %v2145 = vmul.u32 %v2140, %v2141
        %v2146 = vmul.u32 %v2140, %v2142
        %v2147 = vshll.u32 %v2144, 16
        %v2148 = vshrl.u32 %v2144, 16
        %v2149 = vshll.u32 %v2145, 16
        %v2150 = vshrl.u32 %v2145, 16
        %vm2151 = vc.u32 %v2143, %v2147
        %v2152 = vsel %vm2151, 1, 0
        %v2153 = vadd.s32 %v2143, %v2147
        %v2154 = vadd.s32 %v2146, %v2152
        %vm2155 = vc.u32 %v2153, %v2149
        %v2156 = vsel %vm2155, 1, 0
        %v2157 = vadd.s32 %v2153, %v2149
        %v2158 = vadd.s32 %v2154, %v2156
        %v2159 = vadd.s32 %v2158, %v2148
        %v2160 = vadd.s32 %v2159, %v2150
        %v2161 = vmul.u32 %v2116, %v2107
        %v2162 = vadd.s32 %v2138, %v2157
        %vm2163 = vc.u32 %v2138, %v2157
        %v2164 = vadd.s32 %v2160, 1
        %v2165 = vsel %vm2163, %v2164, %v2160
        %v2166 = vadd.s32 %v2161, %v2165
        %v2167 = vadd.s32 %v2166, 536870912
        %v2168 = vshrl.u32 %v2167, 30
        %v2169 = vshll.u32 %v2168, 30
        %v2170 = vsub.s32 %v2166, %v2169
        %vm2171 = vcmp.lt.s32.totalorder %v2170, 0
        %v2172 = vsub.s32 0, %v2170
        %v2173 = vsel %vm2171, %v2172, %v2170
        %v2174 = vclz %v2173
        %v2175 = vsub.s32 %v2174, 2
        %vm2176 = vcmp.gt.s32.totalorder 0, %v2175
        %v2177 = vsel %vm2176, 0, %v2175
        %v2178 = vsub.s32 32, %v2177
        %v2179 = vshll.u32 %v2170, %v2177
        %v2180 = vshrl.u32 %v2162, %v2178
        %v2181 = vor.u32 %v2179, %v2180
        %v2182 = vsub.s32 4294967266, %v2177
        %v2183 = vadd.s32 %v2182, 127
        %v2184 = vshll.u32 %v2183, 23
        %v2185 = vor.u32 4788187, %v2184
        %v2186 = vand.u32 2147483647, %v2185
        %v2188 = vcvt.s32.f32 %v2181
        %v2189 = vmul.f32 %v2188, %v2186
        %v2190 = vxor.u32 %v2189, 2147483648
        %v2191 = vsel %vm2070, %v2190, %v2189
        %v2192 = vsub.s32 4, %v2168
        %v2193 = vsel %vm2070, %v2192, %v2168
        %v2194 = vsel %vm2069, %v515, %v2191
        %v2195 = vsel %vm2069, 0, %v2193
        %v2196 = vmul.f32 %v2194, %v2194
        %v2197 = vmul.f32 %v2196, -0.001358992
        %v2198 = vadd.f32 %v2197, 0.041655596
        %v2199 = vmul.f32 %v2196, %v2198
        %v2200 = vadd.f32 %v2199, -0.4999988
        %v2201 = vmul.f32 %v2196, %v2200
        %v2202 = vadd.f32 1.0, %v2201
        %v2203 = vmul.f32 %v2194, %v2194
        %v2204 = vmul.f32 %v2203, -0.00019511016
        %v2205 = vadd.f32 %v2204, 0.008332121
        %v2206 = vmul.f32 %v2203, %v2205
        %v2207 = vadd.f32 %v2206, -0.16666654
        %v2208 = vmul.f32 %v2203, %v2207
        %v2209 = vadd.f32 %v2208, 1.0
        %v2210 = vmul.f32 %v2209, %v2194
        %vm2211 = vweird.f32 %v515
        %v2212 = vadd.s32 %v2195, 3
        %v2213 = vand.u32 %v2212, 3
        %vm2214 = vcmp.lt.s32.totalorder %v2213, 2
        %vm2215 = vcmp.eq.s32.totalorder %v2213, 0
        %v2216 = vxor.u32 %v2210, 2147483648
        %v2217 = vsel %vm2215, %v2202, %v2216
        %vm2218 = vcmp.eq.s32.totalorder %v2213, 2
        %v2219 = vxor.u32 %v2202, 2147483648
        %v2220 = vsel %vm2218, %v2219, %v2210
        %v2221 = vsel %vm2214, %v2217, %v2220
        %v2222 = vsel %vm2211, nan, %v2221
        %v2223 = vand.u32 2147483647, %v516
        %vm2224 = vcmp.le.f32.partialorder %v2223, 0.7853982
        %vm2225 = vcmp.lt.s32.totalorder %v516, 0
        %v2226 = vand.u32 %v516, 2139095040
        %v2227 = vshrl.u32 %v2226, 23
        %v2228 = vsub.s32 %v2227, 127
        %v2229 = vand.u32 2147483647, %v516
        %v2230 = vand.u32 %v2229, 8388607
        %v2231 = vor.u32 %v2230, 8388608
        %v2232 = vsub.s32 0, %v2231
        %v2233 = vadd.s32 %v2228, 1
        %vm2234 = vcmp.gt.s32.totalorder %v2233, 0
        %v2235 = vsel %vm2234, %v2233, 0
        %v2236 = vshrl.u32 %v2235, 5
        %v2237 = vand.u32 %v2235, 31
        %v2238 = vsub.s32 32, %v2237
        %v2239 = vshrl.u32 683565275, %v2238
        %v2240 = vshll.u32 683565275, %v2237
        %v2241 = vshrl.u32 2475754826, %v2238
        %v2242 = vor.u32 %v2240, %v2241
        %v2243 = vshll.u32 2475754826, %v2237
        %v2244 = vshrl.u32 2131351028, %v2238
        %v2245 = vor.u32 %v2243, %v2244
        %v2246 = vshll.u32 2131351028, %v2237
        %v2247 = vshrl.u32 2102212464, %v2238
        %v2248 = vor.u32 %v2246, %v2247
        %v2249 = vshll.u32 2102212464, %v2237
        %v2250 = vshrl.u32 920167782, %v2238
        %v2251 = vor.u32 %v2249, %v2250
        %v2252 = vshll.u32 920167782, %v2237
        %v2253 = vshrl.u32 1326507024, %v2238
        %v2254 = vor.u32 %v2252, %v2253
        %vm2255 = vcmp.lt.s32.totalorder %v2236, 1
        %vm2256 = vcmp.lt.s32.totalorder %v2236, 2
        %vm2257 = vcmp.lt.s32.totalorder %v2236, 3
        %vm2258 = vcmp.lt.s32.totalorder %v2236, 4
        %v2259 = vsel %vm2255, %v2239, %v2242
        %v2260 = vsel %vm2258, %v2248, 2102212464
        %v2261 = vsel %vm2257, %v2245, %v2260
        %v2262 = vsel %vm2256, %v2259, %v2261
        %v2263 = vsel %vm2255, %v2242, %v2245
        %v2264 = vsel %vm2258, %v2251, 920167782
        %v2265 = vsel %vm2257, %v2248, %v2264
        %v2266 = vsel %vm2256, %v2263, %v2265
        %v2267 = vsel %vm2255, %v2245, %v2248
        %v2268 = vsel %vm2258, %v2254, 1326507024
        %v2269 = vsel %vm2257, %v2251, %v2268
        %v2270 = vsel %vm2256, %v2267, %v2269
        %v2271 = vshll.u32 %v2231, 8
        %v2272 = vand.u32 %v2271, 65535
        %v2273 = vshrl.u32 %v2271, 16
        %v2274 = vand.u32 %v2270, 65535
        %v2275 = vshrl.u32 %v2270, 16
        %v2276 = vmul.u32 %v2272, %v2274
        %v2277 = vmul.u32 %v2272, %v2275
        %v2278 = vmul.u32 %v2273, %v2274
        %v2279 = vmul.u32 %v2273, %v2275
        %v2280 = vshll.u32 %v2277, 16
        %v2281 = vshrl.u32 %v2277, 16
        %v2282 = vshll.u32 %v2278, 16
        %v2283 = vshrl.u32 %v2278, 16
        %vm2284 = vc.u32 %v2276, %v2280
        %v2285 = vsel %vm2284, 1, 0
        %v2286 = vadd.s32 %v2276, %v2280
        %v2287 = vadd.s32 %v2279, %v2285
        %vm2288 = vc.u32 %v2286, %v2282
        %v2289 = vsel %vm2288, 1, 0
        %v2290 = vadd.s32 %v2286, %v2282
        %v2291 = vadd.s32 %v2287, %v2289
        %v2292 = vadd.s32 %v2291, %v2281
        %v2293 = vadd.s32 %v2292, %v2283
        %v2294 = vand.u32 %v2271, 65535
        %v2295 = vshrl.u32 %v2271, 16
        %v2296 = vand.u32 %v2266, 65535
        %v2297 = vshrl.u32 %v2266, 16
        %v2298 = vmul.u32 %v2294, %v2296
        %v2299 = vmul.u32 %v2294, %v2297
        %v2300 = vmul.u32 %v2295, %v2296
        %v2301 = vmul.u32 %v2295, %v2297
        %v2302 = vshll.u32 %v2299, 16
        %v2303 = vshrl.u32 %v2299, 16
        %v2304 = vshll.u32 %v2300, 16
        %v2305 = vshrl.u32 %v2300, 16
        %vm2306 = vc.u32 %v2298, %v2302
        %v2307 = vsel %vm2306, 1, 0
        %v2308 = vadd.s32 %v2298, %v2302
        %v2309 = vadd.s32 %v2301, %v2307
        %vm2310 = vc.u32 %v2308, %v2304
        %v2311 = vsel %vm2310, 1, 0
        %v2312 = vadd.s32 %v2308, %v2304
        %v2313 = vadd.s32 %v2309, %v2311
        %v2314 = vadd.s32 %v2313, %v2303
        %v2315 = vadd.s32 %v2314, %v2305
        %v2316 = vmul.u32 %v2271, %v2262
        %v2317 = vadd.s32 %v2293, %v2312
        %vm2318 = vc.u32 %v2293, %v2312
        %v2319 = vadd.s32 %v2315, 1
        %v2320 = vsel %vm2318, %v2319, %v2315
        %v2321 = vadd.s32 %v2316, %v2320
        %v2322 = vadd.s32 %v2321, 536870912
        %v2323 = vshrl.u32 %v2322, 30
        %v2324 = vshll.u32 %v2323, 30
        %v2325 = vsub.s32 %v2321, %v2324
        %vm2326 = vcmp.lt.s32.totalorder %v2325, 0
        %v2327 = vsub.s32 0, %v2325
        %v2328 = vsel %vm2326, %v2327, %v2325
        %v2329 = vclz %v2328
        %v2330 = vsub.s32 %v2329, 2
        %vm2331 = vcmp.gt.s32.totalorder 0, %v2330
        %v2332 = vsel %vm2331, 0, %v2330
        %v2333 = vsub.s32 32, %v2332
        %v2334 = vshll.u32 %v2325, %v2332
        %v2335 = vshrl.u32 %v2317, %v2333
        %v2336 = vor.u32 %v2334, %v2335
        %v2337 = vsub.s32 4294967266, %v2332
        %v2338 = vadd.s32 %v2337, 127
        %v2339 = vshll.u32 %v2338, 23
        %v2340 = vor.u32 4788187, %v2339
        %v2341 = vand.u32 2147483647, %v2340
        %v2343 = vcvt.s32.f32 %v2336
        %v2344 = vmul.f32 %v2343, %v2341
        %v2345 = vxor.u32 %v2344, 2147483648
        %v2346 = vsel %vm2225, %v2345, %v2344
        %v2347 = vsub.s32 4, %v2323
        %v2348 = vsel %vm2225, %v2347, %v2323
        %v2349 = vsel %vm2224, %v516, %v2346
        %v2350 = vsel %vm2224, 0, %v2348
        %v2351 = vmul.f32 %v2349, %v2349
        %v2352 = vmul.f32 %v2351, -0.001358992
        %v2353 = vadd.f32 %v2352, 0.041655596
        %v2354 = vmul.f32 %v2351, %v2353
        %v2355 = vadd.f32 %v2354, -0.4999988
        %v2356 = vmul.f32 %v2351, %v2355
        %v2357 = vadd.f32 1.0, %v2356
        %v2358 = vmul.f32 %v2349, %v2349
        %v2359 = vmul.f32 %v2358, -0.00019511016
        %v2360 = vadd.f32 %v2359, 0.008332121
        %v2361 = vmul.f32 %v2358, %v2360
        %v2362 = vadd.f32 %v2361, -0.16666654
        %v2363 = vmul.f32 %v2358, %v2362
        %v2364 = vadd.f32 %v2363, 1.0
        %v2365 = vmul.f32 %v2364, %v2349
        %vm2366 = vweird.f32 %v516
        %v2367 = vadd.s32 %v2350, 3
        %v2368 = vand.u32 %v2367, 3
        %vm2369 = vcmp.lt.s32.totalorder %v2368, 2
        %vm2370 = vcmp.eq.s32.totalorder %v2368, 0
        %v2371 = vxor.u32 %v2365, 2147483648
        %v2372 = vsel %vm2370, %v2357, %v2371
        %vm2373 = vcmp.eq.s32.totalorder %v2368, 2
        %v2374 = vxor.u32 %v2357, 2147483648
        %v2375 = vsel %vm2373, %v2374, %v2365
        %v2376 = vsel %vm2369, %v2372, %v2375
        %v2377 = vsel %vm2366, nan, %v2376
        %v2378 = vand.u32 2147483647, %v517
        %vm2379 = vcmp.le.f32.partialorder %v2378, 0.7853982
        %vm2380 = vcmp.lt.s32.totalorder %v517, 0
        %v2381 = vand.u32 %v517, 2139095040
        %v2382 = vshrl.u32 %v2381, 23
        %v2383 = vsub.s32 %v2382, 127
        %v2384 = vand.u32 2147483647, %v517
        %v2385 = vand.u32 %v2384, 8388607
        %v2386 = vor.u32 %v2385, 8388608
        %v2387 = vsub.s32 0, %v2386
        %v2388 = vadd.s32 %v2383, 1
        %vm2389 = vcmp.gt.s32.totalorder %v2388, 0
        %v2390 = vsel %vm2389, %v2388, 0
        %v2391 = vshrl.u32 %v2390, 5
        %v2392 = vand.u32 %v2390, 31
        %v2393 = vsub.s32 32, %v2392
        %v2394 = vshrl.u32 683565275, %v2393
        %v2395 = vshll.u32 683565275, %v2392
        %v2396 = vshrl.u32 2475754826, %v2393
        %v2397 = vor.u32 %v2395, %v2396
        %v2398 = vshll.u32 2475754826, %v2392
        %v2399 = vshrl.u32 2131351028, %v2393
        %v2400 = vor.u32 %v2398, %v2399
        %v2401 = vshll.u32 2131351028, %v2392
        %v2402 = vshrl.u32 2102212464, %v2393
        %v2403 = vor.u32 %v2401, %v2402
        %v2404 = vshll.u32 2102212464, %v2392
        %v2405 = vshrl.u32 920167782, %v2393
        %v2406 = vor.u32 %v2404, %v2405
        %v2407 = vshll.u32 920167782, %v2392
        %v2408 = vshrl.u32 1326507024, %v2393
        %v2409 = vor.u32 %v2407, %v2408
        %vm2410 = vcmp.lt.s32.totalorder %v2391, 1
        %vm2411 = vcmp.lt.s32.totalorder %v2391, 2
        %vm2412 = vcmp.lt.s32.totalorder %v2391, 3
        %vm2413 = vcmp.lt.s32.totalorder %v2391, 4
        %v2414 = vsel %vm2410, %v2394, %v2397
        %v2415 = vsel %vm2413, %v2403, 2102212464
        %v2416 = vsel %vm2412, %v2400, %v2415
        %v2417 = vsel %vm2411, %v2414, %v2416
        %v2418 = vsel %vm2410, %v2397, %v2400
        %v2419 = vsel %vm2413, %v2406, 920167782
        %v2420 = vsel %vm2412, %v2403, %v2419
        %v2421 = vsel %vm2411, %v2418, %v2420
        %v2422 = vsel %vm2410, %v2400, %v2403
        %v2423 = vsel %vm2413, %v2409, 1326507024
        %v2424 = vsel %vm2412, %v2406, %v2423
        %v2425 = vsel %vm2411, %v2422, %v2424
        %v2426 = vshll.u32 %v2386, 8
        %v2427 = vand.u32 %v2426, 65535
        %v2428 = vshrl.u32 %v2426, 16
        %v2429 = vand.u32 %v2425, 65535
        %v2430 = vshrl.u32 %v2425, 16
        %v2431 = vmul.u32 %v2427, %v2429
        %v2432 = vmul.u32 %v2427, %v2430
        %v2433 = vmul.u32 %v2428, %v2429
        %v2434 = vmul.u32 %v2428, %v2430
        %v2435 = vshll.u32 %v2432, 16
        %v2436 = vshrl.u32 %v2432, 16
        %v2437 = vshll.u32 %v2433, 16
        %v2438 = vshrl.u32 %v2433, 16
        %vm2439 = vc.u32 %v2431, %v2435
        %v2440 = vsel %vm2439, 1, 0
        %v2441 = vadd.s32 %v2431, %v2435
        %v2442 = vadd.s32 %v2434, %v2440
        %vm2443 = vc.u32 %v2441, %v2437
        %v2444 = vsel %vm2443, 1, 0
        %v2445 = vadd.s32 %v2441, %v2437
        %v2446 = vadd.s32 %v2442, %v2444
        %v2447 = vadd.s32 %v2446, %v2436
        %v2448 = vadd.s32 %v2447, %v2438
        %v2449 = vand.u32 %v2426, 65535
        %v2450 = vshrl.u32 %v2426, 16
        %v2451 = vand.u32 %v2421, 65535
        %v2452 = vshrl.u32 %v2421, 16
        %v2453 = vmul.u32 %v2449, %v2451
        %v2454 = vmul.u32 %v2449, %v2452
        %v2455 = vmul.u32 %v2450, %v2451
        %v2456 = vmul.u32 %v2450, %v2452
        %v2457 = vshll.u32 %v2454, 16
        %v2458 = vshrl.u32 %v2454, 16
        %v2459 = vshll.u32 %v2455, 16
        %v2460 = vshrl.u32 %v2455, 16
        %vm2461 = vc.u32 %v2453, %v2457
        %v2462 = vsel %vm2461, 1, 0
        %v2463 = vadd.s32 %v2453, %v2457
        %v2464 = vadd.s32 %v2456, %v2462
        %vm2465 = vc.u32 %v2463, %v2459
        %v2466 = vsel %vm2465, 1, 0
        %v2467 = vadd.s32 %v2463, %v2459
        %v2468 = vadd.s32 %v2464, %v2466
        %v2469 = vadd.s32 %v2468, %v2458
        %v2470 = vadd.s32 %v2469, %v2460
        %v2471 = vmul.u32 %v2426, %v2417
        %v2472 = vadd.s32 %v2448, %v2467
        %vm2473 = vc.u32 %v2448, %v2467
        %v2474 = vadd.s32 %v2470, 1
        %v2475 = vsel %vm2473, %v2474, %v2470
        %v2476 = vadd.s32 %v2471, %v2475
        %v2477 = vadd.s32 %v2476, 536870912
        %v2478 = vshrl.u32 %v2477, 30
        %v2479 = vshll.u32 %v2478, 30
        %v2480 = vsub.s32 %v2476, %v2479
        %vm2481 = vcmp.lt.s32.totalorder %v2480, 0
        %v2482 = vsub.s32 0, %v2480
        %v2483 = vsel %vm2481, %v2482, %v2480
        %v2484 = vclz %v2483
        %v2485 = vsub.s32 %v2484, 2
        %vm2486 = vcmp.gt.s32.totalorder 0, %v2485
        %v2487 = vsel %vm2486, 0, %v2485
        %v2488 = vsub.s32 32, %v2487
        %v2489 = vshll.u32 %v2480, %v2487
        %v2490 = vshrl.u32 %v2472, %v2488
        %v2491 = vor.u32 %v2489, %v2490
        %v2492 = vsub.s32 4294967266, %v2487
        %v2493 = vadd.s32 %v2492, 127
        %v2494 = vshll.u32 %v2493, 23
        %v2495 = vor.u32 4788187, %v2494
        %v2496 = vand.u32 2147483647, %v2495
        %v2498 = vcvt.s32.f32 %v2491
        %v2499 = vmul.f32 %v2498, %v2496
        %v2500 = vxor.u32 %v2499, 2147483648
        %v2501 = vsel %vm2380, %v2500, %v2499
        %v2502 = vsub.s32 4, %v2478
        %v2503 = vsel %vm2380, %v2502, %v2478
        %v2504 = vsel %vm2379, %v517, %v2501
        %v2505 = vsel %vm2379, 0, %v2503
        %v2506 = vmul.f32 %v2504, %v2504
        %v2507 = vmul.f32 %v2506, -0.001358992
        %v2508 = vadd.f32 %v2507, 0.041655596
        %v2509 = vmul.f32 %v2506, %v2508
        %v2510 = vadd.f32 %v2509, -0.4999988
        %v2511 = vmul.f32 %v2506, %v2510
        %v2512 = vadd.f32 1.0, %v2511
        %v2513 = vmul.f32 %v2504, %v2504
        %v2514 = vmul.f32 %v2513, -0.00019511016
        %v2515 = vadd.f32 %v2514, 0.008332121
        %v2516 = vmul.f32 %v2513, %v2515
        %v2517 = vadd.f32 %v2516, -0.16666654
        %v2518 = vmul.f32 %v2513, %v2517
        %v2519 = vadd.f32 %v2518, 1.0
        %v2520 = vmul.f32 %v2519, %v2504
        %vm2521 = vweird.f32 %v517
        %v2522 = vadd.s32 %v2505, 3
        %v2523 = vand.u32 %v2522, 3
        %vm2524 = vcmp.lt.s32.totalorder %v2523, 2
        %vm2525 = vcmp.eq.s32.totalorder %v2523, 0
        %v2526 = vxor.u32 %v2520, 2147483648
        %v2527 = vsel %vm2525, %v2512, %v2526
        %vm2528 = vcmp.eq.s32.totalorder %v2523, 2
        %v2529 = vxor.u32 %v2512, 2147483648
        %v2530 = vsel %vm2528, %v2529, %v2520
        %v2531 = vsel %vm2524, %v2527, %v2530
        %v2532 = vsel %vm2521, nan, %v2531
        %v2533 = vld [vmem:[%s3] sm:$0xff]
        %v2534 = vld [vmem:[%s3 + $0x8] sm:$0xff]
        %v2535 = vld [vmem:[%s3 + $0x10] sm:$0xff]
        %v2536 = vld [vmem:[%s3 + $0x18] sm:$0xff]
        %v2537 = vld [vmem:[%s3 + $0x20] sm:$0xff]
        %v2538 = vld [vmem:[%s3 + $0x28] sm:$0xff]
        %v2539 = vld [vmem:[%s3 + $0x30] sm:$0xff]
        %v2540 = vld [vmem:[%s3 + $0x38] sm:$0xff]
        %v2541 = vld [vmem:[%s3 + $0x40] sm:$0xff]
        %v2542 = vld [vmem:[%s3 + $0x48] sm:$0xff]
        %v2543 = vld [vmem:[%s3 + $0x50] sm:$0xff]
        %v2544 = vld [vmem:[%s3 + $0x58] sm:$0xff]
        %v2545 = vld [vmem:[%s3 + $0x60] sm:$0xff]
        %v2546 = vld [vmem:[%s3 + $0x68] sm:$0xff]
        %v2547 = vld [vmem:[%s3 + $0x70] sm:$0xff]
        %v2548 = vld [vmem:[%s3 + $0x78] sm:$0xff]
        %v2549 = vld [vmem:[%s4] sm:$0x1]
        %v2551 = vperm.slane %v2549, 0
        %2553 = vmatpush.msra.mxu0 %v2548
        %2554 = vmatpush.msra.mxu0 %v2547
        %2555 = vmatpush.msra.mxu0 %v2546
        %2556 = vmatpush.msra.mxu0 %v2545
        %2557 = vmatpush.msra.mxu0 %v2544
        %2558 = vmatpush.msra.mxu0 %v2543
        %2559 = vmatpush.msra.mxu0 %v2542
        %2560 = vmatpush.msra.mxu0 %v2541
        %2561 = vmatpush.msra.mxu0 %v2540
        %2562 = vmatpush.msra.mxu0 %v2539
        %2563 = vmatpush.msra.mxu0 %v2538
        %2564 = vmatpush.msra.mxu0 %v2537
        %2565 = vmatpush.msra.mxu0 %v2536
        %2566 = vmatpush.msra.mxu0 %v2535
        %2567 = vmatpush.msra.mxu0 %v2534
        %2568 = vmatpush.msra.mxu0 %v2533
        %2569 = vmatmul.f32.gmra.mxu0 %v672
        %v2570 = vpop.f32.mrf.mxu0
        %v2571 = vadd.f32 %v2551, %v2570
        %2572 = vmatmul.f32.gmra.mxu0 %v827
        %v2573 = vpop.f32.mrf.mxu0
        %v2574 = vadd.f32 %v2551, %v2573
        %2575 = vmatmul.f32.gmra.mxu0 %v982
        %v2576 = vpop.f32.mrf.mxu0
        %v2577 = vadd.f32 %v2551, %v2576
        %2578 = vmatmul.f32.gmra.mxu0 %v1137
        %v2579 = vpop.f32.mrf.mxu0
        %v2580 = vadd.f32 %v2551, %v2579
        %2581 = vmatmul.f32.gmra.mxu0 %v1292
        %v2582 = vpop.f32.mrf.mxu0
        %v2583 = vadd.f32 %v2551, %v2582
        %2584 = vmatmul.f32.gmra.mxu0 %v1447
        %v2585 = vpop.f32.mrf.mxu0
        %v2586 = vadd.f32 %v2551, %v2585
        %2587 = vmatmul.f32.gmra.mxu0 %v1602
        %v2588 = vpop.f32.mrf.mxu0
        %v2589 = vadd.f32 %v2551, %v2588
        %2590 = vmatmul.f32.gmra.mxu0 %v1757
        %v2591 = vpop.f32.mrf.mxu0
        %v2592 = vadd.f32 %v2551, %v2591
        %2593 = vmatmul.f32.gmra.mxu0 %v1912
        %v2594 = vpop.f32.mrf.mxu0
        %v2595 = vadd.f32 %v2551, %v2594
        %2596 = vmatmul.f32.gmra.mxu0 %v2067
        %v2597 = vpop.f32.mrf.mxu0
        %v2598 = vadd.f32 %v2551, %v2597
        %2599 = vmatmul.f32.gmra.mxu0 %v2222
        %v2600 = vpop.f32.mrf.mxu0
        %v2601 = vadd.f32 %v2551, %v2600
        %2602 = vmatmul.f32.gmra.mxu0 %v2377
        %v2603 = vpop.f32.mrf.mxu0
        %v2604 = vadd.f32 %v2551, %v2603
        %2605 = vmatmul.f32.gmra.mxu0 %v2532
        %v2606 = vpop.f32.mrf.mxu0
        %v2607 = vadd.f32 %v2551, %v2606
        %2608 = vdwg.mxu0
        %2609 = vst [vmem:[%s230] sm:$0xff] %v2571
        %2610 = vst [vmem:[%s230 + $0x8] sm:$0xff] %v2574
        %2611 = vst [vmem:[%s230 + $0x10] sm:$0xff] %v2577
        %2612 = vst [vmem:[%s230 + $0x18] sm:$0xff] %v2580
        %2613 = vst [vmem:[%s230 + $0x20] sm:$0xff] %v2583
        %2614 = vst [vmem:[%s230 + $0x28] sm:$0xff] %v2586
        %2615 = vst [vmem:[%s230 + $0x30] sm:$0xff] %v2589
        %2616 = vst [vmem:[%s230 + $0x38] sm:$0xff] %v2592
        %2617 = vst [vmem:[%s230 + $0x40] sm:$0xff] %v2595
        %2618 = vst [vmem:[%s230 + $0x48] sm:$0xff] %v2598
        %2619 = vst [vmem:[%s230 + $0x50] sm:$0xff] %v2601
        %2620 = vst [vmem:[%s230 + $0x58] sm:$0xff] %v2604
        %2621 = vst [vmem:[%s230 + $0x60] sm:$0xff] %v2607
        %s2622 = sand.u32 %s137, 1
        %s2623 = scalar_lea.sflag [#allocation3], %s2622
        %s2624 = sand.u32 %s137, 1
        %s2625 = smul.addr %s2624, 104
        %s2626 = scalar_lea.vmem [#allocation2], %s2625
        // Predicated region
        $region41: #{tpu_custom_call.1} parent=39 // pred_check
          %p2627 = pneg %p147
        $region42: #{tpu_custom_call.1} parent=39 // pred_check_branch
          %2629 = sbr.rel (%p2627) target = $region44
        $region43: #{tpu_custom_call.1} parent=39 // pred_region
          %s2630 = smul.u32 13, %s19
          %s2631 = ssub.s32 25, %s2630
          %p2632 = scmp.lt.s32.totalorder %s2631, 13
          %s2633 = scalar_select %p2632, %s2631, 13
          %s2634 = smul.u32 8, %s2633
          %s2635 = ssub.s32 104, %s2634
          %s2636 = sshll.u32 %s2635, 4
          %2637 = vsyncadd %s2623, %s2636
          %p2638 = scmp.ne.s32.totalorder 0, %s2634
          %s2639 = smul.addr %s2630, 8
          %s2640 = scalar_lea.hbm %s5, %s2639
          %s2641 = smul.u32 8, %s2633
          %s2642 = sshll.u32 %s2626, 4
          %s2643 = int_to_ptr.vmem [resolvable:$true] %s2642
          %s2644 = sshll.u32 %s2640, 4
          %s2645 = int_to_ptr.hbm [resolvable:$true] %s2644
          %s2646 = sshll.u32 %s2641, 4
          %2650 = dma.vmem_to_hbm [thread:$0]  (%p2638), %s2643, %s2646, %s2645, %s2623, 128, 128, 8
        $region44: #{tpu_custom_call.1} parent=39 // pred_fallthru
          _
      $region40: #{tpu_custom_call.1} parent=5 // pred_fallthru
        _
      %p2651 = scmp.le.s32.totalorder 2, %s14
      // Predicated region
      $region45: #{tpu_custom_call.1} parent=5 // pred_check
        %p2652 = pneg %p2651
      $region46: #{tpu_custom_call.1} parent=5 // pred_check_branch
        %2654 = sbr.rel (%p2652) target = $region48
      $region47: #{tpu_custom_call.1} parent=5 // pred_region
        %s2655 = ssub.s32 %s14, 2
        // Predicated region
        $region49: #{tpu_custom_call.1} parent=47 // pred_check
          %p2656 = pneg %p153
        $region50: #{tpu_custom_call.1} parent=47 // pred_check_branch
          %2658 = sbr.rel (%p2656) target = $region52
        $region51: #{tpu_custom_call.1} parent=47 // pred_region
          %s2659 = sand.u32 %s138, 1
          %s2660 = scalar_lea.sflag [#allocation3], %s2659
          %s2661 = sand.u32 %s138, 1
          %s2662 = smul.addr %s2661, 104
          %s2663 = scalar_lea.vmem [#allocation2], %s2662
          %2665 = dma.done %s2660, 1664
        $region52: #{tpu_custom_call.1} parent=47 // pred_fallthru
          _
      $region48: #{tpu_custom_call.1} parent=5 // pred_fallthru
        _
    $region6: #{tpu_custom_call.1} parent=1 // loop_footer
      %s18 = sadd.s32 1, %s14
    $region7: #{tpu_custom_call.1} parent=1 // loop_footer_branch
      %13 = sbr.rel target = $region3
    $region8: #{tpu_custom_call.1} parent=1 // loop_exit
      _
    %2666 = vsyncpa [#allocation3], 1
    %s2667 = scalar_lea.sflag [#allocation3], 1
    %2668 = vsyncpa %s2667, 1

</llo_original>
